<compile_context>
chip_gen: v6e
topology: v6e:2x2x1
jax: 0.10.0
libtpu: 0.0.40
codegen_flags: <defaults>
</compile_context>

<pallas_src>
import functools

import jax
import jax.numpy as jnp
from jax.experimental import pallas as pl
from jax.experimental.pallas import tpu as pltpu


def rnn_kernel(x_ref, wih0t_ref, wiht_ref, whht_ref, wfct_ref, bfc_ref, out_ref,
               *, T: int, B: int):
    """Whole multi-layer tanh-RNN forward in a single kernel invocation.

    x_ref     : (T*B, D)          time-major flattened input
    wih0t_ref : (D, H)            layer-0 input->hidden weight (pre-transposed)
    wiht_ref  : (max(L-1,1),H,H)  input->hidden weights, layers 1..L-1
                                  (pre-transposed; dummy (1,H,H) if L == 1)
    whht_ref  : (L, H, H)         hidden->hidden weights (pre-transposed)
    wfct_ref  : (H, C_pad)        fc weight (pre-transposed, lane-padded)
    bfc_ref   : (1, C_pad)        fc bias (lane-padded)
    out_ref   : (B, C_pad)        logits, lane-dense padded slab
    """
    L, H, _ = whht_ref.shape

    # ---- layer 0: batched input projection (one MXU call for all T steps) ----
    xw = jnp.dot(x_ref[...], wih0t_ref[...],
                 preferred_element_type=jnp.float32)           # (T*B, H)

    w_hh = whht_ref[0]                                         # (H, H), static index
    h = jnp.zeros((B, H), jnp.float32)
    outs = []
    for t in range(T):                                         # static, unrolled
        h = jnp.tanh(xw[t * B:(t + 1) * B, :]
                     + jnp.dot(h, w_hh, preferred_element_type=jnp.float32))
        if L > 1:
            outs.append(h)

    # ---- layers 1..L-1: hoisted batched input projection over the previous
    #      layer's full (time-major) output sequence, then the serial
    #      h @ W_hh recurrence ----
    for l in range(1, L):
        seq = jnp.concatenate(outs, axis=0)                    # (T*B, H) time-major
        inp = jnp.dot(seq, wiht_ref[l - 1],
                      preferred_element_type=jnp.float32)      # (T*B, H)

        w_hh = whht_ref[l]
        h = jnp.zeros((B, H), jnp.float32)
        last = (l == L - 1)
        outs = []
        for t in range(T):
            h = jnp.tanh(inp[t * B:(t + 1) * B, :]
                         + jnp.dot(h, w_hh, preferred_element_type=jnp.float32))
            if not last:                 # last layer only needs the final h
                outs.append(h)

    # ---- fc on the final hidden state (lane-dense store) ----
    out_ref[...] = (
        jnp.dot(h, wfct_ref[...], preferred_element_type=jnp.float32)
        + bfc_ref[...]
    )


def rnn_forward(x, w_ih0, w_hh_all, w_ih_rest, w_fc, b_fc):
    """x: (B, T, D); weights in PyTorch (out, in) convention; returns (B, C)."""
    B, T, D = x.shape
    L, H, _ = w_hh_all.shape
    C = w_fc.shape[0]
    C_pad = ((C + 127) // 128) * 128

    # Host-side layout plumbing (done once, outside the kernel):
    #   * time-major flatten of x so per-timestep slices are contiguous rows,
    #   * fold PyTorch (out, in) weights into matmul-friendly (in, out),
    #   * lane-pad the fc weight/bias so the output store is unmasked.
    x_tm = jnp.transpose(x, (1, 0, 2)).reshape(T * B, D)         # (T*B, D)
    w_ih0_t = w_ih0.T                                            # (D, H)
    w_hh_t = jnp.transpose(w_hh_all, (0, 2, 1))                  # (L, H, H)
    if L > 1:
        w_ih_rest_t = jnp.transpose(w_ih_rest, (0, 2, 1))        # (L-1, H, H)
    else:
        w_ih_rest_t = jnp.zeros((1, H, H), jnp.float32)          # dummy, never read
    w_fc_t = jnp.zeros((H, C_pad), jnp.float32).at[:, :C].set(w_fc.T)
    b_fc_p = jnp.zeros((1, C_pad), jnp.float32).at[:, :C].set(b_fc.reshape(1, C))

    kernel = functools.partial(rnn_kernel, T=T, B=B)

    out_padded = pl.pallas_call(
        kernel,
        out_shape=jax.ShapeDtypeStruct((B, C_pad), jnp.float32),
        in_specs=[pl.BlockSpec(memory_space=pltpu.MemorySpace.VMEM)] * 6,
        out_specs=pl.BlockSpec(memory_space=pltpu.MemorySpace.VMEM),
    )(x_tm, w_ih0_t, w_ih_rest_t, w_hh_t, w_fc_t, b_fc_p)

    return out_padded[:, :C]


def rnn_reference(x, w_ih0, w_hh_all, w_ih_rest, w_fc, b_fc):
    """Pure-JAX reference matching torch.nn.RNN(tanh, batch_first) + Linear."""
    B, T, D = x.shape
    L, H, _ = w_hh_all.shape
    seq = x
    for l in range(L):
        w_ih = w_ih0 if l == 0 else w_ih_rest[l - 1]
        w_hh = w_hh_all[l]
        h = jnp.zeros((B, H), jnp.float32)
        outs = []
        for t in range(T):
            h = jnp.tanh(seq[:, t, :] @ w_ih.T + h @ w_hh.T)
            outs.append(h)
        seq = jnp.stack(outs, axis=1)
    return seq[:, -1, :] @ w_fc.T + b_fc.reshape(1, -1)


if __name__ == "__main__":
    # Small shapes consistent with the module's forward.
    B, T, D, H, L, C = 2, 8, 16, 32, 2, 10

    key = jax.random.PRNGKey(0)
    k = jax.random.split(key, 5)

    # "random_normal"-style deterministic init; all biases are zero
    # (reset_parameters zeros every bias).
    w_ih0 = 0.1 * jax.random.normal(k[0], (H, D), jnp.float32)          # weight_ih_l0
    w_hh_all = 0.1 * jax.random.normal(k[1], (L, H, H), jnp.float32)    # weight_hh_l{0..L-1}
    w_ih_rest = 0.1 * jax.random.normal(k[2], (max(L - 1, 1), H, H),
                                        jnp.float32)                    # weight_ih_l{1..L-1}
    w_fc = 0.1 * jax.random.normal(k[3], (C, H), jnp.float32)           # fc.weight
    b_fc = jnp.zeros((C,), jnp.float32)                                 # fc.bias (zeros)

    x = jax.random.normal(k[4], (B, T, D), jnp.float32)

    out = rnn_forward(x, w_ih0, w_hh_all, w_ih_rest, w_fc, b_fc)
    out = jax.block_until_ready(out)

    ref = rnn_reference(x, w_ih0, w_hh_all, w_ih_rest, w_fc, b_fc)
    assert out.shape == (B, C)
    assert jnp.allclose(out, ref, atol=1e-5, rtol=1e-5), (out, ref)

    print("KERNEL_OK")
</pallas_src>

<mosaic_0001>
module attributes {stable_mosaic.version = 11 : i64} {
  func.func @rnn_kernel(%arg0: memref<16x16xf32, #tpu.memory_space<vmem>>, %arg1: memref<16x32xf32, #tpu.memory_space<vmem>>, %arg2: memref<1x32x32xf32, #tpu.memory_space<vmem>>, %arg3: memref<2x32x32xf32, #tpu.memory_space<vmem>>, %arg4: memref<32x128xf32, #tpu.memory_space<vmem>>, %arg5: memref<1x128xf32, #tpu.memory_space<vmem>>, %arg6: memref<2x128xf32, #tpu.memory_space<vmem>>) attributes {dimension_semantics = [], scalar_prefetch = 0 : i64, scratch_operands = 0 : i64, tpu.core_type = #tpu.core_type<tc>} {
    %c0 = arith.constant 0 : index
    %c0_0 = arith.constant 0 : index
    %0 = vector.load %arg0[%c0, %c0_0] : memref<16x16xf32, #tpu.memory_space<vmem>>, vector<16x16xf32>
    %c0_1 = arith.constant 0 : index
    %c0_2 = arith.constant 0 : index
    %1 = vector.load %arg1[%c0_1, %c0_2] : memref<16x32xf32, #tpu.memory_space<vmem>>, vector<16x32xf32>
    %cst = arith.constant dense<0.000000e+00> : vector<16x32xf32>
    %2 = tpu.matmul %0, %1, %cst {dimension_numbers = #tpu.dot_dimension_numbers<[1], [0], [0], [1], [0, 0, 1, 1], [], []>} : vector<16x16xf32>, vector<16x32xf32>, vector<16x32xf32> -> vector<16x32xf32>
    %c0_3 = arith.constant 0 : index
    %c0_4 = arith.constant 0 : index
    %c0_5 = arith.constant 0 : index
    %3 = vector.load %arg3[%c0_3, %c0_4, %c0_5] : memref<2x32x32xf32, #tpu.memory_space<vmem>>, vector<1x32x32xf32>
    %4 = vector.shape_cast %3 : vector<1x32x32xf32> to vector<32x32xf32>
    %cst_6 = arith.constant 0.000000e+00 : f32
    %5 = vector.broadcast %cst_6 : f32 to vector<2x32xf32>
    %6 = vector.extract_strided_slice %2 {offsets = [0, 0], sizes = [2, 32], strides = [1, 1]} : vector<16x32xf32> to vector<2x32xf32>
    %cst_7 = arith.constant dense<0.000000e+00> : vector<2x32xf32>
    %7 = tpu.matmul %5, %4, %cst_7 {dimension_numbers = #tpu.dot_dimension_numbers<[1], [0], [0], [1], [0, 0, 1, 1], [], []>} : vector<2x32xf32>, vector<32x32xf32>, vector<2x32xf32> -> vector<2x32xf32>
    %8 = arith.addf %6, %7 : vector<2x32xf32>
    %9 = math.tanh %8 : vector<2x32xf32>
    %10 = vector.extract_strided_slice %2 {offsets = [2, 0], sizes = [2, 32], strides = [1, 1]} : vector<16x32xf32> to vector<2x32xf32>
    %cst_8 = arith.constant dense<0.000000e+00> : vector<2x32xf32>
    %11 = tpu.matmul %9, %4, %cst_8 {dimension_numbers = #tpu.dot_dimension_numbers<[1], [0], [0], [1], [0, 0, 1, 1], [], []>} : vector<2x32xf32>, vector<32x32xf32>, vector<2x32xf32> -> vector<2x32xf32>
    %12 = arith.addf %10, %11 : vector<2x32xf32>
    %13 = math.tanh %12 : vector<2x32xf32>
    %14 = vector.extract_strided_slice %2 {offsets = [4, 0], sizes = [2, 32], strides = [1, 1]} : vector<16x32xf32> to vector<2x32xf32>
    %cst_9 = arith.constant dense<0.000000e+00> : vector<2x32xf32>
    %15 = tpu.matmul %13, %4, %cst_9 {dimension_numbers = #tpu.dot_dimension_numbers<[1], [0], [0], [1], [0, 0, 1, 1], [], []>} : vector<2x32xf32>, vector<32x32xf32>, vector<2x32xf32> -> vector<2x32xf32>
    %16 = arith.addf %14, %15 : vector<2x32xf32>
    %17 = math.tanh %16 : vector<2x32xf32>
    %18 = vector.extract_strided_slice %2 {offsets = [6, 0], sizes = [2, 32], strides = [1, 1]} : vector<16x32xf32> to vector<2x32xf32>
    %cst_10 = arith.constant dense<0.000000e+00> : vector<2x32xf32>
    %19 = tpu.matmul %17, %4, %cst_10 {dimension_numbers = #tpu.dot_dimension_numbers<[1], [0], [0], [1], [0, 0, 1, 1], [], []>} : vector<2x32xf32>, vector<32x32xf32>, vector<2x32xf32> -> vector<2x32xf32>
    %20 = arith.addf %18, %19 : vector<2x32xf32>
    %21 = math.tanh %20 : vector<2x32xf32>
    %22 = vector.extract_strided_slice %2 {offsets = [8, 0], sizes = [2, 32], strides = [1, 1]} : vector<16x32xf32> to vector<2x32xf32>
    %cst_11 = arith.constant dense<0.000000e+00> : vector<2x32xf32>
    %23 = tpu.matmul %21, %4, %cst_11 {dimension_numbers = #tpu.dot_dimension_numbers<[1], [0], [0], [1], [0, 0, 1, 1], [], []>} : vector<2x32xf32>, vector<32x32xf32>, vector<2x32xf32> -> vector<2x32xf32>
    %24 = arith.addf %22, %23 : vector<2x32xf32>
    %25 = math.tanh %24 : vector<2x32xf32>
    %26 = vector.extract_strided_slice %2 {offsets = [10, 0], sizes = [2, 32], strides = [1, 1]} : vector<16x32xf32> to vector<2x32xf32>
    %cst_12 = arith.constant dense<0.000000e+00> : vector<2x32xf32>
    %27 = tpu.matmul %25, %4, %cst_12 {dimension_numbers = #tpu.dot_dimension_numbers<[1], [0], [0], [1], [0, 0, 1, 1], [], []>} : vector<2x32xf32>, vector<32x32xf32>, vector<2x32xf32> -> vector<2x32xf32>
    %28 = arith.addf %26, %27 : vector<2x32xf32>
    %29 = math.tanh %28 : vector<2x32xf32>
    %30 = vector.extract_strided_slice %2 {offsets = [12, 0], sizes = [2, 32], strides = [1, 1]} : vector<16x32xf32> to vector<2x32xf32>
    %cst_13 = arith.constant dense<0.000000e+00> : vector<2x32xf32>
    %31 = tpu.matmul %29, %4, %cst_13 {dimension_numbers = #tpu.dot_dimension_numbers<[1], [0], [0], [1], [0, 0, 1, 1], [], []>} : vector<2x32xf32>, vector<32x32xf32>, vector<2x32xf32> -> vector<2x32xf32>
    %32 = arith.addf %30, %31 : vector<2x32xf32>
    %33 = math.tanh %32 : vector<2x32xf32>
    %34 = vector.extract_strided_slice %2 {offsets = [14, 0], sizes = [2, 32], strides = [1, 1]} : vector<16x32xf32> to vector<2x32xf32>
    %cst_14 = arith.constant dense<0.000000e+00> : vector<2x32xf32>
    %35 = tpu.matmul %33, %4, %cst_14 {dimension_numbers = #tpu.dot_dimension_numbers<[1], [0], [0], [1], [0, 0, 1, 1], [], []>} : vector<2x32xf32>, vector<32x32xf32>, vector<2x32xf32> -> vector<2x32xf32>
    %36 = arith.addf %34, %35 : vector<2x32xf32>
    %37 = math.tanh %36 : vector<2x32xf32>
    %38 = tpu.concatenate %9, %13, %17, %21, %25, %29, %33, %37 in 0 : vector<2x32xf32>, vector<2x32xf32>, vector<2x32xf32>, vector<2x32xf32>, vector<2x32xf32>, vector<2x32xf32>, vector<2x32xf32>, vector<2x32xf32> -> vector<16x32xf32>
    %c0_15 = arith.constant 0 : index
    %c0_16 = arith.constant 0 : index
    %c0_17 = arith.constant 0 : index
    %39 = vector.load %arg2[%c0_15, %c0_16, %c0_17] : memref<1x32x32xf32, #tpu.memory_space<vmem>>, vector<1x32x32xf32>
    %40 = vector.shape_cast %39 : vector<1x32x32xf32> to vector<32x32xf32>
    %cst_18 = arith.constant dense<0.000000e+00> : vector<16x32xf32>
    %41 = tpu.matmul %38, %40, %cst_18 {dimension_numbers = #tpu.dot_dimension_numbers<[1], [0], [0], [1], [0, 0, 1, 1], [], []>} : vector<16x32xf32>, vector<32x32xf32>, vector<16x32xf32> -> vector<16x32xf32>
    %c1 = arith.constant 1 : index
    %c0_19 = arith.constant 0 : index
    %c0_20 = arith.constant 0 : index
    %42 = vector.load %arg3[%c1, %c0_19, %c0_20] : memref<2x32x32xf32, #tpu.memory_space<vmem>>, vector<1x32x32xf32>
    %43 = vector.shape_cast %42 : vector<1x32x32xf32> to vector<32x32xf32>
    %cst_21 = arith.constant 0.000000e+00 : f32
    %44 = vector.broadcast %cst_21 : f32 to vector<2x32xf32>
    %45 = vector.extract_strided_slice %41 {offsets = [0, 0], sizes = [2, 32], strides = [1, 1]} : vector<16x32xf32> to vector<2x32xf32>
    %cst_22 = arith.constant dense<0.000000e+00> : vector<2x32xf32>
    %46 = tpu.matmul %44, %43, %cst_22 {dimension_numbers = #tpu.dot_dimension_numbers<[1], [0], [0], [1], [0, 0, 1, 1], [], []>} : vector<2x32xf32>, vector<32x32xf32>, vector<2x32xf32> -> vector<2x32xf32>
    %47 = arith.addf %45, %46 : vector<2x32xf32>
    %48 = math.tanh %47 : vector<2x32xf32>
    %49 = vector.extract_strided_slice %41 {offsets = [2, 0], sizes = [2, 32], strides = [1, 1]} : vector<16x32xf32> to vector<2x32xf32>
    %cst_23 = arith.constant dense<0.000000e+00> : vector<2x32xf32>
    %50 = tpu.matmul %48, %43, %cst_23 {dimension_numbers = #tpu.dot_dimension_numbers<[1], [0], [0], [1], [0, 0, 1, 1], [], []>} : vector<2x32xf32>, vector<32x32xf32>, vector<2x32xf32> -> vector<2x32xf32>
    %51 = arith.addf %49, %50 : vector<2x32xf32>
    %52 = math.tanh %51 : vector<2x32xf32>
    %53 = vector.extract_strided_slice %41 {offsets = [4, 0], sizes = [2, 32], strides = [1, 1]} : vector<16x32xf32> to vector<2x32xf32>
    %cst_24 = arith.constant dense<0.000000e+00> : vector<2x32xf32>
    %54 = tpu.matmul %52, %43, %cst_24 {dimension_numbers = #tpu.dot_dimension_numbers<[1], [0], [0], [1], [0, 0, 1, 1], [], []>} : vector<2x32xf32>, vector<32x32xf32>, vector<2x32xf32> -> vector<2x32xf32>
    %55 = arith.addf %53, %54 : vector<2x32xf32>
    %56 = math.tanh %55 : vector<2x32xf32>
    %57 = vector.extract_strided_slice %41 {offsets = [6, 0], sizes = [2, 32], strides = [1, 1]} : vector<16x32xf32> to vector<2x32xf32>
    %cst_25 = arith.constant dense<0.000000e+00> : vector<2x32xf32>
    %58 = tpu.matmul %56, %43, %cst_25 {dimension_numbers = #tpu.dot_dimension_numbers<[1], [0], [0], [1], [0, 0, 1, 1], [], []>} : vector<2x32xf32>, vector<32x32xf32>, vector<2x32xf32> -> vector<2x32xf32>
    %59 = arith.addf %57, %58 : vector<2x32xf32>
    %60 = math.tanh %59 : vector<2x32xf32>
    %61 = vector.extract_strided_slice %41 {offsets = [8, 0], sizes = [2, 32], strides = [1, 1]} : vector<16x32xf32> to vector<2x32xf32>
    %cst_26 = arith.constant dense<0.000000e+00> : vector<2x32xf32>
    %62 = tpu.matmul %60, %43, %cst_26 {dimension_numbers = #tpu.dot_dimension_numbers<[1], [0], [0], [1], [0, 0, 1, 1], [], []>} : vector<2x32xf32>, vector<32x32xf32>, vector<2x32xf32> -> vector<2x32xf32>
    %63 = arith.addf %61, %62 : vector<2x32xf32>
    %64 = math.tanh %63 : vector<2x32xf32>
    %65 = vector.extract_strided_slice %41 {offsets = [10, 0], sizes = [2, 32], strides = [1, 1]} : vector<16x32xf32> to vector<2x32xf32>
    %cst_27 = arith.constant dense<0.000000e+00> : vector<2x32xf32>
    %66 = tpu.matmul %64, %43, %cst_27 {dimension_numbers = #tpu.dot_dimension_numbers<[1], [0], [0], [1], [0, 0, 1, 1], [], []>} : vector<2x32xf32>, vector<32x32xf32>, vector<2x32xf32> -> vector<2x32xf32>
    %67 = arith.addf %65, %66 : vector<2x32xf32>
    %68 = math.tanh %67 : vector<2x32xf32>
    %69 = vector.extract_strided_slice %41 {offsets = [12, 0], sizes = [2, 32], strides = [1, 1]} : vector<16x32xf32> to vector<2x32xf32>
    %cst_28 = arith.constant dense<0.000000e+00> : vector<2x32xf32>
    %70 = tpu.matmul %68, %43, %cst_28 {dimension_numbers = #tpu.dot_dimension_numbers<[1], [0], [0], [1], [0, 0, 1, 1], [], []>} : vector<2x32xf32>, vector<32x32xf32>, vector<2x32xf32> -> vector<2x32xf32>
    %71 = arith.addf %69, %70 : vector<2x32xf32>
    %72 = math.tanh %71 : vector<2x32xf32>
    %73 = vector.extract_strided_slice %41 {offsets = [14, 0], sizes = [2, 32], strides = [1, 1]} : vector<16x32xf32> to vector<2x32xf32>
    %cst_29 = arith.constant dense<0.000000e+00> : vector<2x32xf32>
    %74 = tpu.matmul %72, %43, %cst_29 {dimension_numbers = #tpu.dot_dimension_numbers<[1], [0], [0], [1], [0, 0, 1, 1], [], []>} : vector<2x32xf32>, vector<32x32xf32>, vector<2x32xf32> -> vector<2x32xf32>
    %75 = arith.addf %73, %74 : vector<2x32xf32>
    %76 = math.tanh %75 : vector<2x32xf32>
    %c0_30 = arith.constant 0 : index
    %c0_31 = arith.constant 0 : index
    %77 = vector.load %arg4[%c0_30, %c0_31] : memref<32x128xf32, #tpu.memory_space<vmem>>, vector<32x128xf32>
    %cst_32 = arith.constant dense<0.000000e+00> : vector<2x128xf32>
    %78 = tpu.matmul %76, %77, %cst_32 {dimension_numbers = #tpu.dot_dimension_numbers<[1], [0], [0], [1], [0, 0, 1, 1], [], []>} : vector<2x32xf32>, vector<32x128xf32>, vector<2x128xf32> -> vector<2x128xf32>
    %c0_33 = arith.constant 0 : index
    %c0_34 = arith.constant 0 : index
    %79 = vector.load %arg5[%c0_33, %c0_34] : memref<1x128xf32, #tpu.memory_space<vmem>>, vector<1x128xf32>
    %80 = vector.broadcast %79 : vector<1x128xf32> to vector<2x128xf32>
    %81 = arith.addf %78, %80 : vector<2x128xf32>
    %c0_35 = arith.constant 0 : index
    %c0_36 = arith.constant 0 : index
    %82 = vector.load %arg6[%c0_35, %c0_36] : memref<2x128xf32, #tpu.memory_space<vmem>>, vector<2x128xf32>
    tpu.vector_store %arg6[%c0_35, %c0_36], %81 {strides = array<i32>} : memref<2x128xf32, #tpu.memory_space<vmem>>, vector<2x128xf32>,
    return
  }
}

</mosaic_0001>

<llo_original>
// kernel: tpu_custom_call.1
$region0: #{tpu_custom_call.1}
  #allocation0 [shape = 'u32[]', space=smem, size = 0x4, offset = 0x4, fixed_abs, tag = 'smem constant byte address 0x4 - core index']
  #allocation1 [shape = 'u32[144,128]{1,0:T(1,128)}', space=vmem, size = 0x12000, scoped, tag = 'internal scratch']
  %s0 = inlined_call_operand.hbm [shape: f32[16,16], index: 0, kind: input, shape index: {}]
  %s1 = inlined_call_operand.hbm [shape: f32[16,32], index: 1, kind: input, shape index: {}]
  %s2 = inlined_call_operand.hbm [shape: f32[1,32,32], index: 2, kind: input, shape index: {}]
  %s3 = inlined_call_operand.hbm [shape: f32[2,32,32], index: 3, kind: input, shape index: {}]
  %s4 = inlined_call_operand.hbm [shape: f32[32,128], index: 4, kind: input, shape index: {}]
  %s5 = inlined_call_operand.vmem [shape: f32[1,128], index: 5, kind: input, shape index: {}]
  %s6 = inlined_call_operand.hbm [shape: f32[2,128], index: 6, kind: output, shape index: {}]
  %s7 = sld [smem:[#allocation0]]
  $region54: #{tpu_custom_call.1} parent=0
    _
  %s9 = ssub.s32 1, %s7
  %s10 = scalar_select 0, %s9, %s7
  $region1: #{tpu_custom_call.1} parent=0
    #allocation2 [shape = 'u8[8192]{0}', space=vmem, size = 0x2000, scoped, tag = 'input window, operand 0, single buffered']
    #allocation3 [shape = 's32[1]{0}', space=sflag, size = 0x4, scoped, tag = 'scoped memory for tpu_custom_call.1']
    #allocation4 [shape = 's32[1]{0}', space=sflag, size = 0x4, scoped, tag = 'scoped memory for tpu_custom_call.1']
    #allocation5 [shape = 'u8[8192]{0}', space=vmem, size = 0x2000, scoped, tag = 'input window, operand 1, single buffered']
    #allocation6 [shape = 's32[1]{0}', space=sflag, size = 0x4, scoped, tag = 'scoped memory for tpu_custom_call.1']
    #allocation7 [shape = 'u8[16384]{0}', space=vmem, size = 0x4000, scoped, tag = 'input window, operand 2, single buffered']
    #allocation8 [shape = 'u8[32768]{0}', space=vmem, size = 0x8000, scoped, tag = 'input window, operand 3, single buffered']
    #allocation9 [shape = 's32[1]{0}', space=sflag, size = 0x4, scoped, tag = 'scoped memory for tpu_custom_call.1']
    #allocation10 [shape = 'u8[16384]{0}', space=vmem, size = 0x4000, scoped, tag = 'input window, operand 4, single buffered']
    #allocation11 [shape = 'u8[1024]{0}', space=vmem, size = 0x400, scoped, tag = 'output window, operand 0, single buffered']
    %11 = vsyncpa [#allocation3], 0
    %12 = vsyncpa [#allocation6], 0
    %13 = vsyncpa [#allocation9], 0
    %14 = vsyncpa [#allocation4], 0
    // Predicated region
    $region2: #{tpu_custom_call.1} parent=1 // pred_check
      _
    $region3: #{tpu_custom_call.1} parent=1 // pred_check_branch
      %16 = sbr.rel (0) target = $region5
    $region4: #{tpu_custom_call.1} parent=1 // pred_region
      %s18 = ssub.s32 256, 256
      %19 = vsyncadd [#allocation3], %s18
      %s20 = sshll.u32 [#allocation2], 4
      %s21 = int_to_ptr.vmem [resolvable:$true] %s20
      %26 = dma.hbm_to_vmem [thread:$0]  %s0, 256, %s21, [#allocation3], 128, 128, 8
    $region5: #{tpu_custom_call.1} parent=1 // pred_fallthru
      _
    // Predicated region
    $region6: #{tpu_custom_call.1} parent=1 // pred_check
      _
    $region7: #{tpu_custom_call.1} parent=1 // pred_check_branch
      %28 = sbr.rel (0) target = $region9
    $region8: #{tpu_custom_call.1} parent=1 // pred_region
      %s30 = ssub.s32 256, 256
      %31 = vsyncadd [#allocation6], %s30
      %s32 = sshll.u32 [#allocation5], 4
      %s33 = int_to_ptr.vmem [resolvable:$true] %s32
      %38 = dma.hbm_to_vmem [thread:$0]  %s1, 256, %s33, [#allocation6], 128, 128, 8
    $region9: #{tpu_custom_call.1} parent=1 // pred_fallthru
      _
    // Predicated region
    $region10: #{tpu_custom_call.1} parent=1 // pred_check
      _
    $region11: #{tpu_custom_call.1} parent=1 // pred_check_branch
      %40 = sbr.rel (0) target = $region13
    $region12: #{tpu_custom_call.1} parent=1 // pred_region
      %s42 = ssub.s32 512, 512
      %43 = vsyncadd [#allocation6], %s42
      %s44 = sshll.u32 [#allocation7], 4
      %s45 = int_to_ptr.vmem [resolvable:$true] %s44
      %50 = dma.hbm_to_vmem [thread:$0]  %s2, 512, %s45, [#allocation6], 128, 128, 8
    $region13: #{tpu_custom_call.1} parent=1 // pred_fallthru
      _
    // Predicated region
    $region14: #{tpu_custom_call.1} parent=1 // pred_check
      _
    $region15: #{tpu_custom_call.1} parent=1 // pred_check_branch
      %52 = sbr.rel (0) target = $region17
    $region16: #{tpu_custom_call.1} parent=1 // pred_region
      %s54 = ssub.s32 1024, 1024
      %55 = vsyncadd [#allocation9], %s54
      %s56 = sshll.u32 [#allocation8], 4
      %s57 = int_to_ptr.vmem [resolvable:$true] %s56
      %62 = dma.hbm_to_vmem [thread:$0]  %s3, 1024, %s57, [#allocation9], 128, 128, 8
    $region17: #{tpu_custom_call.1} parent=1 // pred_fallthru
      _
    // Predicated region
    $region18: #{tpu_custom_call.1} parent=1 // pred_check
      _
    $region19: #{tpu_custom_call.1} parent=1 // pred_check_branch
      %64 = sbr.rel (0) target = $region21
    $region20: #{tpu_custom_call.1} parent=1 // pred_region
      %s66 = ssub.s32 512, 512
      %67 = vsyncadd [#allocation9], %s66
      %s68 = sshll.u32 [#allocation10], 4
      %s69 = int_to_ptr.vmem [resolvable:$true] %s68
      %74 = dma.hbm_to_vmem [thread:$0]  %s4, 512, %s69, [#allocation9], 128, 128, 8
    $region21: #{tpu_custom_call.1} parent=1 // pred_fallthru
      _
    // Predicated region
    $region22: #{tpu_custom_call.1} parent=1 // pred_check
      _
    $region23: #{tpu_custom_call.1} parent=1 // pred_check_branch
      %76 = sbr.rel (0) target = $region25
    $region24: #{tpu_custom_call.1} parent=1 // pred_region
      _
    $region25: #{tpu_custom_call.1} parent=1 // pred_fallthru
      _
    // Predicated region
    $region26: #{tpu_custom_call.1} parent=1 // pred_check
      _
    $region27: #{tpu_custom_call.1} parent=1 // pred_check_branch
      %78 = sbr.rel (0) target = $region29
    $region28: #{tpu_custom_call.1} parent=1 // pred_region
      %79 = dma.done [#allocation3], 256
    $region29: #{tpu_custom_call.1} parent=1 // pred_fallthru
      _
    // Predicated region
    $region30: #{tpu_custom_call.1} parent=1 // pred_check
      _
    $region31: #{tpu_custom_call.1} parent=1 // pred_check_branch
      %81 = sbr.rel (0) target = $region33
    $region32: #{tpu_custom_call.1} parent=1 // pred_region
      %82 = dma.done [#allocation6], 256
    $region33: #{tpu_custom_call.1} parent=1 // pred_fallthru
      _
    // Predicated region
    $region34: #{tpu_custom_call.1} parent=1 // pred_check
      _
    $region35: #{tpu_custom_call.1} parent=1 // pred_check_branch
      %84 = sbr.rel (0) target = $region37
    $region36: #{tpu_custom_call.1} parent=1 // pred_region
      %85 = dma.done [#allocation6], 512
    $region37: #{tpu_custom_call.1} parent=1 // pred_fallthru
      _
    // Predicated region
    $region38: #{tpu_custom_call.1} parent=1 // pred_check
      _
    $region39: #{tpu_custom_call.1} parent=1 // pred_check_branch
      %87 = sbr.rel (0) target = $region41
    $region40: #{tpu_custom_call.1} parent=1 // pred_region
      %88 = dma.done [#allocation9], 1024
    $region41: #{tpu_custom_call.1} parent=1 // pred_fallthru
      _
    // Predicated region
    $region42: #{tpu_custom_call.1} parent=1 // pred_check
      _
    $region43: #{tpu_custom_call.1} parent=1 // pred_check_branch
      %90 = sbr.rel (0) target = $region45
    $region44: #{tpu_custom_call.1} parent=1 // pred_region
      %91 = dma.done [#allocation9], 512
    $region45: #{tpu_custom_call.1} parent=1 // pred_fallthru
      _
    %v92 = vld [vmem:[#allocation2] sm:$0xff]
    %v93 = vld [vmem:[#allocation2 + $0x8] sm:$0xff]
    %v94 = vld [vmem:[#allocation5] sm:$0xff]
    %v95 = vld [vmem:[#allocation5 + $0x8] sm:$0xff]
    %vm96 = vcmask 130048
    %v98 = vsel %vm96, %v92, 0
    %v101 = vsel %vm96, %v93, 0
    %103 = vmatprep.subr.mxu0 0.0
    %104 = vmatpush1.msra.mxu0 0.0
    %105 = vmatprep.subr.mxu0 0.0
    %106 = vmatpush1.msra.mxu0 0.0
    %107 = vmatprep.subr.mxu0 0.0
    %108 = vmatpush1.msra.mxu0 0.0
    %109 = vmatprep.subr.mxu0 0.0
    %110 = vmatpush1.msra.mxu0 0.0
    %111 = vmatprep.subr.mxu0 0.0
    %112 = vmatpush1.msra.mxu0 0.0
    %113 = vmatprep.subr.mxu0 0.0
    %114 = vmatpush1.msra.mxu0 0.0
    %115 = vmatprep.subr.mxu0 0.0
    %116 = vmatpush1.msra.mxu0 0.0
    %117 = vmatprep.subr.mxu0 0.0
    %118 = vmatpush1.msra.mxu0 0.0
    %119 = vmatprep.subr.mxu0 0.0
    %120 = vmatpush1.msra.mxu0 0.0
    %121 = vmatprep.subr.mxu0 0.0
    %122 = vmatpush1.msra.mxu0 0.0
    %123 = vmatprep.subr.mxu0 0.0
    %124 = vmatpush1.msra.mxu0 0.0
    %125 = vmatprep.subr.mxu0 0.0
    %126 = vmatpush1.msra.mxu0 0.0
    %127 = vmatprep.subr.mxu0 0.0
    %128 = vmatpush1.msra.mxu0 0.0
    %129 = vmatprep.subr.mxu0 0.0
    %130 = vmatpush1.msra.mxu0 0.0
    %131 = vmatprep.subr.mxu0 0.0
    %132 = vmatpush1.msra.mxu0 %v95
    %133 = vmatprep.subr.mxu0 0.0
    %134 = vmatpush1.msra.mxu0 %v94
    %135 = vmatprep.subr.mxu0 0.0
    %136 = vmatpush2.msra.mxu0 0.0
    %137 = vmatprep.subr.mxu0 0.0
    %138 = vmatpush2.msra.mxu0 0.0
    %139 = vmatprep.subr.mxu0 0.0
    %140 = vmatpush2.msra.mxu0 0.0
    %141 = vmatprep.subr.mxu0 0.0
    %142 = vmatpush2.msra.mxu0 0.0
    %143 = vmatprep.subr.mxu0 0.0
    %144 = vmatpush2.msra.mxu0 0.0
    %145 = vmatprep.subr.mxu0 0.0
    %146 = vmatpush2.msra.mxu0 0.0
    %147 = vmatprep.subr.mxu0 0.0
    %148 = vmatpush2.msra.mxu0 0.0
    %149 = vmatprep.subr.mxu0 0.0
    %150 = vmatpush2.msra.mxu0 0.0
    %151 = vmatprep.subr.mxu0 0.0
    %152 = vmatpush2.msra.mxu0 0.0
    %153 = vmatprep.subr.mxu0 0.0
    %154 = vmatpush2.msra.mxu0 0.0
    %155 = vmatprep.subr.mxu0 0.0
    %156 = vmatpush2.msra.mxu0 0.0
    %157 = vmatprep.subr.mxu0 0.0
    %158 = vmatpush2.msra.mxu0 0.0
    %159 = vmatprep.subr.mxu0 0.0
    %160 = vmatpush2.msra.mxu0 0.0
    %161 = vmatprep.subr.mxu0 0.0
    %162 = vmatpush2.msra.mxu0 0.0
    %163 = vmatprep.subr.mxu0 0.0
    %164 = vmatpush2.msra.mxu0 0.0
    %165 = vmatprep.subr.mxu0 0.0
    %166 = vmatpush2.msra.mxu0 0.0
    %167 = vmatprep.mubr.f32.mxu0 0.0
    %168 = vmatmul.mubr.f32.gmra.mxu0 %v98
    %v169 = vpop.f32.mrf.mxu0
    %v170 = vadd.f32 0.0, %v169
    %v171 = vpop.f32.mrf.mxu0
    %172 = vmatprep.mubr.f32.mxu0 0.0
    %173 = vmatmul.mubr.f32.gmra.mxu0 %v101
    %v174 = vpop.f32.mrf.mxu0
    %v175 = vadd.f32 0.0, %v174
    %v176 = vpop.f32.mrf.mxu0
    %177 = vdwg.mxu0
    %v178 = vld [vmem:[#allocation8] sm:$0xff]
    %v179 = vld [vmem:[#allocation8 + $0x8] sm:$0xff]
    %v180 = vld [vmem:[#allocation8 + $0x10] sm:$0xff]
    %v181 = vld [vmem:[#allocation8 + $0x18] sm:$0xff]
    %vm182 = vcmask 261120
    %v184 = vsel %vm182, 0.0, 0
    %186 = vmatprep.subr.mxu0 0.0
    %187 = vmatpush1.msra.mxu0 0.0
    %188 = vmatprep.subr.mxu0 0.0
    %189 = vmatpush1.msra.mxu0 0.0
    %190 = vmatprep.subr.mxu0 0.0
    %191 = vmatpush1.msra.mxu0 0.0
    %192 = vmatprep.subr.mxu0 0.0
    %193 = vmatpush1.msra.mxu0 0.0
    %194 = vmatprep.subr.mxu0 0.0
    %195 = vmatpush1.msra.mxu0 0.0
    %196 = vmatprep.subr.mxu0 0.0
    %197 = vmatpush1.msra.mxu0 0.0
    %198 = vmatprep.subr.mxu0 0.0
    %199 = vmatpush1.msra.mxu0 0.0
    %200 = vmatprep.subr.mxu0 0.0
    %201 = vmatpush1.msra.mxu0 0.0
    %202 = vmatprep.subr.mxu0 0.0
    %203 = vmatpush1.msra.mxu0 0.0
    %204 = vmatprep.subr.mxu0 0.0
    %205 = vmatpush1.msra.mxu0 0.0
    %206 = vmatprep.subr.mxu0 0.0
    %207 = vmatpush1.msra.mxu0 0.0
    %208 = vmatprep.subr.mxu0 0.0
    %209 = vmatpush1.msra.mxu0 0.0
    %210 = vmatprep.subr.mxu0 0.0
    %211 = vmatpush1.msra.mxu0 %v181
    %212 = vmatprep.subr.mxu0 0.0
    %213 = vmatpush1.msra.mxu0 %v180
    %214 = vmatprep.subr.mxu0 0.0
    %215 = vmatpush1.msra.mxu0 %v179
    %216 = vmatprep.subr.mxu0 0.0
    %217 = vmatpush1.msra.mxu0 %v178
    %218 = vmatprep.subr.mxu0 0.0
    %219 = vmatpush2.msra.mxu0 0.0
    %220 = vmatprep.subr.mxu0 0.0
    %221 = vmatpush2.msra.mxu0 0.0
    %222 = vmatprep.subr.mxu0 0.0
    %223 = vmatpush2.msra.mxu0 0.0
    %224 = vmatprep.subr.mxu0 0.0
    %225 = vmatpush2.msra.mxu0 0.0
    %226 = vmatprep.subr.mxu0 0.0
    %227 = vmatpush2.msra.mxu0 0.0
    %228 = vmatprep.subr.mxu0 0.0
    %229 = vmatpush2.msra.mxu0 0.0
    %230 = vmatprep.subr.mxu0 0.0
    %231 = vmatpush2.msra.mxu0 0.0
    %232 = vmatprep.subr.mxu0 0.0
    %233 = vmatpush2.msra.mxu0 0.0
    %234 = vmatprep.subr.mxu0 0.0
    %235 = vmatpush2.msra.mxu0 0.0
    %236 = vmatprep.subr.mxu0 0.0
    %237 = vmatpush2.msra.mxu0 0.0
    %238 = vmatprep.subr.mxu0 0.0
    %239 = vmatpush2.msra.mxu0 0.0
    %240 = vmatprep.subr.mxu0 0.0
    %241 = vmatpush2.msra.mxu0 0.0
    %242 = vmatprep.subr.mxu0 0.0
    %243 = vmatpush2.msra.mxu0 0.0
    %244 = vmatprep.subr.mxu0 0.0
    %245 = vmatpush2.msra.mxu0 0.0
    %246 = vmatprep.subr.mxu0 0.0
    %247 = vmatpush2.msra.mxu0 0.0
    %248 = vmatprep.subr.mxu0 0.0
    %249 = vmatpush2.msra.mxu0 0.0
    %250 = vmatprep.mubr.f32.mxu0 0.0
    %251 = vmatmul.mubr.f32.gmra.mxu0 %v184
    %v252 = vpop.f32.mrf.mxu0
    %v253 = vadd.f32 0.0, %v252
    %v254 = vpop.f32.mrf.mxu0
    %255 = vdwg.mxu0
    %v256 = vadd.f32 %v170, %v253
    %v257 = vtanh.pop %v256
    %v259 = vsel %vm182, %v257, 0
    %261 = vmatprep.subr.mxu0 0.0
    %262 = vmatpush1.msra.mxu0 0.0
    %263 = vmatprep.subr.mxu0 0.0
    %264 = vmatpush1.msra.mxu0 0.0
    %265 = vmatprep.subr.mxu0 0.0
    %266 = vmatpush1.msra.mxu0 0.0
    %267 = vmatprep.subr.mxu0 0.0
    %268 = vmatpush1.msra.mxu0 0.0
    %269 = vmatprep.subr.mxu0 0.0
    %270 = vmatpush1.msra.mxu0 0.0
    %271 = vmatprep.subr.mxu0 0.0
    %272 = vmatpush1.msra.mxu0 0.0
    %273 = vmatprep.subr.mxu0 0.0
    %274 = vmatpush1.msra.mxu0 0.0
    %275 = vmatprep.subr.mxu0 0.0
    %276 = vmatpush1.msra.mxu0 0.0
    %277 = vmatprep.subr.mxu0 0.0
    %278 = vmatpush1.msra.mxu0 0.0
    %279 = vmatprep.subr.mxu0 0.0
    %280 = vmatpush1.msra.mxu0 0.0
    %281 = vmatprep.subr.mxu0 0.0
    %282 = vmatpush1.msra.mxu0 0.0
    %283 = vmatprep.subr.mxu0 0.0
    %284 = vmatpush1.msra.mxu0 0.0
    %285 = vmatprep.subr.mxu0 0.0
    %286 = vmatpush1.msra.mxu0 %v181
    %287 = vmatprep.subr.mxu0 0.0
    %288 = vmatpush1.msra.mxu0 %v180
    %289 = vmatprep.subr.mxu0 0.0
    %290 = vmatpush1.msra.mxu0 %v179
    %291 = vmatprep.subr.mxu0 0.0
    %292 = vmatpush1.msra.mxu0 %v178
    %293 = vmatprep.subr.mxu0 0.0
    %294 = vmatpush2.msra.mxu0 0.0
    %295 = vmatprep.subr.mxu0 0.0
    %296 = vmatpush2.msra.mxu0 0.0
    %297 = vmatprep.subr.mxu0 0.0
    %298 = vmatpush2.msra.mxu0 0.0
    %299 = vmatprep.subr.mxu0 0.0
    %300 = vmatpush2.msra.mxu0 0.0
    %301 = vmatprep.subr.mxu0 0.0
    %302 = vmatpush2.msra.mxu0 0.0
    %303 = vmatprep.subr.mxu0 0.0
    %304 = vmatpush2.msra.mxu0 0.0
    %305 = vmatprep.subr.mxu0 0.0
    %306 = vmatpush2.msra.mxu0 0.0
    %307 = vmatprep.subr.mxu0 0.0
    %308 = vmatpush2.msra.mxu0 0.0
    %309 = vmatprep.subr.mxu0 0.0
    %310 = vmatpush2.msra.mxu0 0.0
    %311 = vmatprep.subr.mxu0 0.0
    %312 = vmatpush2.msra.mxu0 0.0
    %313 = vmatprep.subr.mxu0 0.0
    %314 = vmatpush2.msra.mxu0 0.0
    %315 = vmatprep.subr.mxu0 0.0
    %316 = vmatpush2.msra.mxu0 0.0
    %317 = vmatprep.subr.mxu0 0.0
    %318 = vmatpush2.msra.mxu0 0.0
    %319 = vmatprep.subr.mxu0 0.0
    %320 = vmatpush2.msra.mxu0 0.0
    %321 = vmatprep.subr.mxu0 0.0
    %322 = vmatpush2.msra.mxu0 0.0
    %323 = vmatprep.subr.mxu0 0.0
    %324 = vmatpush2.msra.mxu0 0.0
    %325 = vmatprep.mubr.f32.mxu0 0.0
    %326 = vmatmul.mubr.f32.gmra.mxu0 %v259
    %v327 = vpop.f32.mrf.mxu0
    %v328 = vadd.f32 0.0, %v327
    %v329 = vpop.f32.mrf.mxu0
    %330 = vdwg.mxu0
    %v332 = vrot.slane %v328, 6
    %v334 = vadd.f32 %v170, %v332
    %v335 = vtanh.pop %v334
    %v337 = vrot.slane %v335, 2
    %v338 = vsel %vm182, %v337, 0
    %340 = vmatprep.subr.mxu0 0.0
    %341 = vmatpush1.msra.mxu0 0.0
    %342 = vmatprep.subr.mxu0 0.0
    %343 = vmatpush1.msra.mxu0 0.0
    %344 = vmatprep.subr.mxu0 0.0
    %345 = vmatpush1.msra.mxu0 0.0
    %346 = vmatprep.subr.mxu0 0.0
    %347 = vmatpush1.msra.mxu0 0.0
    %348 = vmatprep.subr.mxu0 0.0
    %349 = vmatpush1.msra.mxu0 0.0
    %350 = vmatprep.subr.mxu0 0.0
    %351 = vmatpush1.msra.mxu0 0.0
    %352 = vmatprep.subr.mxu0 0.0
    %353 = vmatpush1.msra.mxu0 0.0
    %354 = vmatprep.subr.mxu0 0.0
    %355 = vmatpush1.msra.mxu0 0.0
    %356 = vmatprep.subr.mxu0 0.0
    %357 = vmatpush1.msra.mxu0 0.0
    %358 = vmatprep.subr.mxu0 0.0
    %359 = vmatpush1.msra.mxu0 0.0
    %360 = vmatprep.subr.mxu0 0.0
    %361 = vmatpush1.msra.mxu0 0.0
    %362 = vmatprep.subr.mxu0 0.0
    %363 = vmatpush1.msra.mxu0 0.0
    %364 = vmatprep.subr.mxu0 0.0
    %365 = vmatpush1.msra.mxu0 %v181
    %366 = vmatprep.subr.mxu0 0.0
    %367 = vmatpush1.msra.mxu0 %v180
    %368 = vmatprep.subr.mxu0 0.0
    %369 = vmatpush1.msra.mxu0 %v179
    %370 = vmatprep.subr.mxu0 0.0
    %371 = vmatpush1.msra.mxu0 %v178
    %372 = vmatprep.subr.mxu0 0.0
    %373 = vmatpush2.msra.mxu0 0.0
    %374 = vmatprep.subr.mxu0 0.0
    %375 = vmatpush2.msra.mxu0 0.0
    %376 = vmatprep.subr.mxu0 0.0
    %377 = vmatpush2.msra.mxu0 0.0
    %378 = vmatprep.subr.mxu0 0.0
    %379 = vmatpush2.msra.mxu0 0.0
    %380 = vmatprep.subr.mxu0 0.0
    %381 = vmatpush2.msra.mxu0 0.0
    %382 = vmatprep.subr.mxu0 0.0
    %383 = vmatpush2.msra.mxu0 0.0
    %384 = vmatprep.subr.mxu0 0.0
    %385 = vmatpush2.msra.mxu0 0.0
    %386 = vmatprep.subr.mxu0 0.0
    %387 = vmatpush2.msra.mxu0 0.0
    %388 = vmatprep.subr.mxu0 0.0
    %389 = vmatpush2.msra.mxu0 0.0
    %390 = vmatprep.subr.mxu0 0.0
    %391 = vmatpush2.msra.mxu0 0.0
    %392 = vmatprep.subr.mxu0 0.0
    %393 = vmatpush2.msra.mxu0 0.0
    %394 = vmatprep.subr.mxu0 0.0
    %395 = vmatpush2.msra.mxu0 0.0
    %396 = vmatprep.subr.mxu0 0.0
    %397 = vmatpush2.msra.mxu0 0.0
    %398 = vmatprep.subr.mxu0 0.0
    %399 = vmatpush2.msra.mxu0 0.0
    %400 = vmatprep.subr.mxu0 0.0
    %401 = vmatpush2.msra.mxu0 0.0
    %402 = vmatprep.subr.mxu0 0.0
    %403 = vmatpush2.msra.mxu0 0.0
    %404 = vmatprep.mubr.f32.mxu0 0.0
    %405 = vmatmul.mubr.f32.gmra.mxu0 %v338
    %v406 = vpop.f32.mrf.mxu0
    %v407 = vadd.f32 0.0, %v406
    %v408 = vpop.f32.mrf.mxu0
    %409 = vdwg.mxu0
    %v411 = vrot.slane %v407, 4
    %v413 = vadd.f32 %v170, %v411
    %v414 = vtanh.pop %v413
    %v416 = vrot.slane %v414, 4
    %v417 = vsel %vm182, %v416, 0
    %419 = vmatprep.subr.mxu0 0.0
    %420 = vmatpush1.msra.mxu0 0.0
    %421 = vmatprep.subr.mxu0 0.0
    %422 = vmatpush1.msra.mxu0 0.0
    %423 = vmatprep.subr.mxu0 0.0
    %424 = vmatpush1.msra.mxu0 0.0
    %425 = vmatprep.subr.mxu0 0.0
    %426 = vmatpush1.msra.mxu0 0.0
    %427 = vmatprep.subr.mxu0 0.0
    %428 = vmatpush1.msra.mxu0 0.0
    %429 = vmatprep.subr.mxu0 0.0
    %430 = vmatpush1.msra.mxu0 0.0
    %431 = vmatprep.subr.mxu0 0.0
    %432 = vmatpush1.msra.mxu0 0.0
    %433 = vmatprep.subr.mxu0 0.0
    %434 = vmatpush1.msra.mxu0 0.0
    %435 = vmatprep.subr.mxu0 0.0
    %436 = vmatpush1.msra.mxu0 0.0
    %437 = vmatprep.subr.mxu0 0.0
    %438 = vmatpush1.msra.mxu0 0.0
    %439 = vmatprep.subr.mxu0 0.0
    %440 = vmatpush1.msra.mxu0 0.0
    %441 = vmatprep.subr.mxu0 0.0
    %442 = vmatpush1.msra.mxu0 0.0
    %443 = vmatprep.subr.mxu0 0.0
    %444 = vmatpush1.msra.mxu0 %v181
    %445 = vmatprep.subr.mxu0 0.0
    %446 = vmatpush1.msra.mxu0 %v180
    %447 = vmatprep.subr.mxu0 0.0
    %448 = vmatpush1.msra.mxu0 %v179
    %449 = vmatprep.subr.mxu0 0.0
    %450 = vmatpush1.msra.mxu0 %v178
    %451 = vmatprep.subr.mxu0 0.0
    %452 = vmatpush2.msra.mxu0 0.0
    %453 = vmatprep.subr.mxu0 0.0
    %454 = vmatpush2.msra.mxu0 0.0
    %455 = vmatprep.subr.mxu0 0.0
    %456 = vmatpush2.msra.mxu0 0.0
    %457 = vmatprep.subr.mxu0 0.0
    %458 = vmatpush2.msra.mxu0 0.0
    %459 = vmatprep.subr.mxu0 0.0
    %460 = vmatpush2.msra.mxu0 0.0
    %461 = vmatprep.subr.mxu0 0.0
    %462 = vmatpush2.msra.mxu0 0.0
    %463 = vmatprep.subr.mxu0 0.0
    %464 = vmatpush2.msra.mxu0 0.0
    %465 = vmatprep.subr.mxu0 0.0
    %466 = vmatpush2.msra.mxu0 0.0
    %467 = vmatprep.subr.mxu0 0.0
    %468 = vmatpush2.msra.mxu0 0.0
    %469 = vmatprep.subr.mxu0 0.0
    %470 = vmatpush2.msra.mxu0 0.0
    %471 = vmatprep.subr.mxu0 0.0
    %472 = vmatpush2.msra.mxu0 0.0
    %473 = vmatprep.subr.mxu0 0.0
    %474 = vmatpush2.msra.mxu0 0.0
    %475 = vmatprep.subr.mxu0 0.0
    %476 = vmatpush2.msra.mxu0 0.0
    %477 = vmatprep.subr.mxu0 0.0
    %478 = vmatpush2.msra.mxu0 0.0
    %479 = vmatprep.subr.mxu0 0.0
    %480 = vmatpush2.msra.mxu0 0.0
    %481 = vmatprep.subr.mxu0 0.0
    %482 = vmatpush2.msra.mxu0 0.0
    %483 = vmatprep.mubr.f32.mxu0 0.0
    %484 = vmatmul.mubr.f32.gmra.mxu0 %v417
    %v485 = vpop.f32.mrf.mxu0
    %v486 = vadd.f32 0.0, %v485
    %v487 = vpop.f32.mrf.mxu0
    %488 = vdwg.mxu0
    %v490 = vrot.slane %v486, 2
    %v492 = vadd.f32 %v170, %v490
    %v493 = vtanh.pop %v492
    %v495 = vrot.slane %v493, 6
    %v496 = vsel %vm182, %v495, 0
    %498 = vmatprep.subr.mxu0 0.0
    %499 = vmatpush1.msra.mxu0 0.0
    %500 = vmatprep.subr.mxu0 0.0
    %501 = vmatpush1.msra.mxu0 0.0
    %502 = vmatprep.subr.mxu0 0.0
    %503 = vmatpush1.msra.mxu0 0.0
    %504 = vmatprep.subr.mxu0 0.0
    %505 = vmatpush1.msra.mxu0 0.0
    %506 = vmatprep.subr.mxu0 0.0
    %507 = vmatpush1.msra.mxu0 0.0
    %508 = vmatprep.subr.mxu0 0.0
    %509 = vmatpush1.msra.mxu0 0.0
    %510 = vmatprep.subr.mxu0 0.0
    %511 = vmatpush1.msra.mxu0 0.0
    %512 = vmatprep.subr.mxu0 0.0
    %513 = vmatpush1.msra.mxu0 0.0
    %514 = vmatprep.subr.mxu0 0.0
    %515 = vmatpush1.msra.mxu0 0.0
    %516 = vmatprep.subr.mxu0 0.0
    %517 = vmatpush1.msra.mxu0 0.0
    %518 = vmatprep.subr.mxu0 0.0
    %519 = vmatpush1.msra.mxu0 0.0
    %520 = vmatprep.subr.mxu0 0.0
    %521 = vmatpush1.msra.mxu0 0.0
    %522 = vmatprep.subr.mxu0 0.0
    %523 = vmatpush1.msra.mxu0 %v181
    %524 = vmatprep.subr.mxu0 0.0
    %525 = vmatpush1.msra.mxu0 %v180
    %526 = vmatprep.subr.mxu0 0.0
    %527 = vmatpush1.msra.mxu0 %v179
    %528 = vmatprep.subr.mxu0 0.0
    %529 = vmatpush1.msra.mxu0 %v178
    %530 = vmatprep.subr.mxu0 0.0
    %531 = vmatpush2.msra.mxu0 0.0
    %532 = vmatprep.subr.mxu0 0.0
    %533 = vmatpush2.msra.mxu0 0.0
    %534 = vmatprep.subr.mxu0 0.0
    %535 = vmatpush2.msra.mxu0 0.0
    %536 = vmatprep.subr.mxu0 0.0
    %537 = vmatpush2.msra.mxu0 0.0
    %538 = vmatprep.subr.mxu0 0.0
    %539 = vmatpush2.msra.mxu0 0.0
    %540 = vmatprep.subr.mxu0 0.0
    %541 = vmatpush2.msra.mxu0 0.0
    %542 = vmatprep.subr.mxu0 0.0
    %543 = vmatpush2.msra.mxu0 0.0
    %544 = vmatprep.subr.mxu0 0.0
    %545 = vmatpush2.msra.mxu0 0.0
    %546 = vmatprep.subr.mxu0 0.0
    %547 = vmatpush2.msra.mxu0 0.0
    %548 = vmatprep.subr.mxu0 0.0
    %549 = vmatpush2.msra.mxu0 0.0
    %550 = vmatprep.subr.mxu0 0.0
    %551 = vmatpush2.msra.mxu0 0.0
    %552 = vmatprep.subr.mxu0 0.0
    %553 = vmatpush2.msra.mxu0 0.0
    %554 = vmatprep.subr.mxu0 0.0
    %555 = vmatpush2.msra.mxu0 0.0
    %556 = vmatprep.subr.mxu0 0.0
    %557 = vmatpush2.msra.mxu0 0.0
    %558 = vmatprep.subr.mxu0 0.0
    %559 = vmatpush2.msra.mxu0 0.0
    %560 = vmatprep.subr.mxu0 0.0
    %561 = vmatpush2.msra.mxu0 0.0
    %562 = vmatprep.mubr.f32.mxu0 0.0
    %563 = vmatmul.mubr.f32.gmra.mxu0 %v496
    %v564 = vpop.f32.mrf.mxu0
    %v565 = vadd.f32 0.0, %v564
    %v566 = vpop.f32.mrf.mxu0
    %567 = vdwg.mxu0
    %v568 = vadd.f32 %v175, %v565
    %v569 = vtanh.pop %v568
    %v571 = vsel %vm182, %v569, 0
    %573 = vmatprep.subr.mxu0 0.0
    %574 = vmatpush1.msra.mxu0 0.0
    %575 = vmatprep.subr.mxu0 0.0
    %576 = vmatpush1.msra.mxu0 0.0
    %577 = vmatprep.subr.mxu0 0.0
    %578 = vmatpush1.msra.mxu0 0.0
    %579 = vmatprep.subr.mxu0 0.0
    %580 = vmatpush1.msra.mxu0 0.0
    %581 = vmatprep.subr.mxu0 0.0
    %582 = vmatpush1.msra.mxu0 0.0
    %583 = vmatprep.subr.mxu0 0.0
    %584 = vmatpush1.msra.mxu0 0.0
    %585 = vmatprep.subr.mxu0 0.0
    %586 = vmatpush1.msra.mxu0 0.0
    %587 = vmatprep.subr.mxu0 0.0
    %588 = vmatpush1.msra.mxu0 0.0
    %589 = vmatprep.subr.mxu0 0.0
    %590 = vmatpush1.msra.mxu0 0.0
    %591 = vmatprep.subr.mxu0 0.0
    %592 = vmatpush1.msra.mxu0 0.0
    %593 = vmatprep.subr.mxu0 0.0
    %594 = vmatpush1.msra.mxu0 0.0
    %595 = vmatprep.subr.mxu0 0.0
    %596 = vmatpush1.msra.mxu0 0.0
    %597 = vmatprep.subr.mxu0 0.0
    %598 = vmatpush1.msra.mxu0 %v181
    %599 = vmatprep.subr.mxu0 0.0
    %600 = vmatpush1.msra.mxu0 %v180
    %601 = vmatprep.subr.mxu0 0.0
    %602 = vmatpush1.msra.mxu0 %v179
    %603 = vmatprep.subr.mxu0 0.0
    %604 = vmatpush1.msra.mxu0 %v178
    %605 = vmatprep.subr.mxu0 0.0
    %606 = vmatpush2.msra.mxu0 0.0
    %607 = vmatprep.subr.mxu0 0.0
    %608 = vmatpush2.msra.mxu0 0.0
    %609 = vmatprep.subr.mxu0 0.0
    %610 = vmatpush2.msra.mxu0 0.0
    %611 = vmatprep.subr.mxu0 0.0
    %612 = vmatpush2.msra.mxu0 0.0
    %613 = vmatprep.subr.mxu0 0.0
    %614 = vmatpush2.msra.mxu0 0.0
    %615 = vmatprep.subr.mxu0 0.0
    %616 = vmatpush2.msra.mxu0 0.0
    %617 = vmatprep.subr.mxu0 0.0
    %618 = vmatpush2.msra.mxu0 0.0
    %619 = vmatprep.subr.mxu0 0.0
    %620 = vmatpush2.msra.mxu0 0.0
    %621 = vmatprep.subr.mxu0 0.0
    %622 = vmatpush2.msra.mxu0 0.0
    %623 = vmatprep.subr.mxu0 0.0
    %624 = vmatpush2.msra.mxu0 0.0
    %625 = vmatprep.subr.mxu0 0.0
    %626 = vmatpush2.msra.mxu0 0.0
    %627 = vmatprep.subr.mxu0 0.0
    %628 = vmatpush2.msra.mxu0 0.0
    %629 = vmatprep.subr.mxu0 0.0
    %630 = vmatpush2.msra.mxu0 0.0
    %631 = vmatprep.subr.mxu0 0.0
    %632 = vmatpush2.msra.mxu0 0.0
    %633 = vmatprep.subr.mxu0 0.0
    %634 = vmatpush2.msra.mxu0 0.0
    %635 = vmatprep.subr.mxu0 0.0
    %636 = vmatpush2.msra.mxu0 0.0
    %637 = vmatprep.mubr.f32.mxu0 0.0
    %638 = vmatmul.mubr.f32.gmra.mxu0 %v571
    %v639 = vpop.f32.mrf.mxu0
    %v640 = vadd.f32 0.0, %v639
    %v641 = vpop.f32.mrf.mxu0
    %642 = vdwg.mxu0
    %v644 = vrot.slane %v640, 6
    %v646 = vadd.f32 %v175, %v644
    %v647 = vtanh.pop %v646
    %v649 = vrot.slane %v647, 2
    %v650 = vsel %vm182, %v649, 0
    %652 = vmatprep.subr.mxu0 0.0
    %653 = vmatpush1.msra.mxu0 0.0
    %654 = vmatprep.subr.mxu0 0.0
    %655 = vmatpush1.msra.mxu0 0.0
    %656 = vmatprep.subr.mxu0 0.0
    %657 = vmatpush1.msra.mxu0 0.0
    %658 = vmatprep.subr.mxu0 0.0
    %659 = vmatpush1.msra.mxu0 0.0
    %660 = vmatprep.subr.mxu0 0.0
    %661 = vmatpush1.msra.mxu0 0.0
    %662 = vmatprep.subr.mxu0 0.0
    %663 = vmatpush1.msra.mxu0 0.0
    %664 = vmatprep.subr.mxu0 0.0
    %665 = vmatpush1.msra.mxu0 0.0
    %666 = vmatprep.subr.mxu0 0.0
    %667 = vmatpush1.msra.mxu0 0.0
    %668 = vmatprep.subr.mxu0 0.0
    %669 = vmatpush1.msra.mxu0 0.0
    %670 = vmatprep.subr.mxu0 0.0
    %671 = vmatpush1.msra.mxu0 0.0
    %672 = vmatprep.subr.mxu0 0.0
    %673 = vmatpush1.msra.mxu0 0.0
    %674 = vmatprep.subr.mxu0 0.0
    %675 = vmatpush1.msra.mxu0 0.0
    %676 = vmatprep.subr.mxu0 0.0
    %677 = vmatpush1.msra.mxu0 %v181
    %678 = vmatprep.subr.mxu0 0.0
    %679 = vmatpush1.msra.mxu0 %v180
    %680 = vmatprep.subr.mxu0 0.0
    %681 = vmatpush1.msra.mxu0 %v179
    %682 = vmatprep.subr.mxu0 0.0
    %683 = vmatpush1.msra.mxu0 %v178
    %684 = vmatprep.subr.mxu0 0.0
    %685 = vmatpush2.msra.mxu0 0.0
    %686 = vmatprep.subr.mxu0 0.0
    %687 = vmatpush2.msra.mxu0 0.0
    %688 = vmatprep.subr.mxu0 0.0
    %689 = vmatpush2.msra.mxu0 0.0
    %690 = vmatprep.subr.mxu0 0.0
    %691 = vmatpush2.msra.mxu0 0.0
    %692 = vmatprep.subr.mxu0 0.0
    %693 = vmatpush2.msra.mxu0 0.0
    %694 = vmatprep.subr.mxu0 0.0
    %695 = vmatpush2.msra.mxu0 0.0
    %696 = vmatprep.subr.mxu0 0.0
    %697 = vmatpush2.msra.mxu0 0.0
    %698 = vmatprep.subr.mxu0 0.0
    %699 = vmatpush2.msra.mxu0 0.0
    %700 = vmatprep.subr.mxu0 0.0
    %701 = vmatpush2.msra.mxu0 0.0
    %702 = vmatprep.subr.mxu0 0.0
    %703 = vmatpush2.msra.mxu0 0.0
    %704 = vmatprep.subr.mxu0 0.0
    %705 = vmatpush2.msra.mxu0 0.0
    %706 = vmatprep.subr.mxu0 0.0
    %707 = vmatpush2.msra.mxu0 0.0
    %708 = vmatprep.subr.mxu0 0.0
    %709 = vmatpush2.msra.mxu0 0.0
    %710 = vmatprep.subr.mxu0 0.0
    %711 = vmatpush2.msra.mxu0 0.0
    %712 = vmatprep.subr.mxu0 0.0
    %713 = vmatpush2.msra.mxu0 0.0
    %714 = vmatprep.subr.mxu0 0.0
    %715 = vmatpush2.msra.mxu0 0.0
    %716 = vmatprep.mubr.f32.mxu0 0.0
    %717 = vmatmul.mubr.f32.gmra.mxu0 %v650
    %v718 = vpop.f32.mrf.mxu0
    %v719 = vadd.f32 0.0, %v718
    %v720 = vpop.f32.mrf.mxu0
    %721 = vdwg.mxu0
    %v723 = vrot.slane %v719, 4
    %v725 = vadd.f32 %v175, %v723
    %v726 = vtanh.pop %v725
    %v728 = vrot.slane %v726, 4
    %v729 = vsel %vm182, %v728, 0
    %731 = vmatprep.subr.mxu0 0.0
    %732 = vmatpush1.msra.mxu0 0.0
    %733 = vmatprep.subr.mxu0 0.0
    %734 = vmatpush1.msra.mxu0 0.0
    %735 = vmatprep.subr.mxu0 0.0
    %736 = vmatpush1.msra.mxu0 0.0
    %737 = vmatprep.subr.mxu0 0.0
    %738 = vmatpush1.msra.mxu0 0.0
    %739 = vmatprep.subr.mxu0 0.0
    %740 = vmatpush1.msra.mxu0 0.0
    %741 = vmatprep.subr.mxu0 0.0
    %742 = vmatpush1.msra.mxu0 0.0
    %743 = vmatprep.subr.mxu0 0.0
    %744 = vmatpush1.msra.mxu0 0.0
    %745 = vmatprep.subr.mxu0 0.0
    %746 = vmatpush1.msra.mxu0 0.0
    %747 = vmatprep.subr.mxu0 0.0
    %748 = vmatpush1.msra.mxu0 0.0
    %749 = vmatprep.subr.mxu0 0.0
    %750 = vmatpush1.msra.mxu0 0.0
    %751 = vmatprep.subr.mxu0 0.0
    %752 = vmatpush1.msra.mxu0 0.0
    %753 = vmatprep.subr.mxu0 0.0
    %754 = vmatpush1.msra.mxu0 0.0
    %755 = vmatprep.subr.mxu0 0.0
    %756 = vmatpush1.msra.mxu0 %v181
    %757 = vmatprep.subr.mxu0 0.0
    %758 = vmatpush1.msra.mxu0 %v180
    %759 = vmatprep.subr.mxu0 0.0
    %760 = vmatpush1.msra.mxu0 %v179
    %761 = vmatprep.subr.mxu0 0.0
    %762 = vmatpush1.msra.mxu0 %v178
    %763 = vmatprep.subr.mxu0 0.0
    %764 = vmatpush2.msra.mxu0 0.0
    %765 = vmatprep.subr.mxu0 0.0
    %766 = vmatpush2.msra.mxu0 0.0
    %767 = vmatprep.subr.mxu0 0.0
    %768 = vmatpush2.msra.mxu0 0.0
    %769 = vmatprep.subr.mxu0 0.0
    %770 = vmatpush2.msra.mxu0 0.0
    %771 = vmatprep.subr.mxu0 0.0
    %772 = vmatpush2.msra.mxu0 0.0
    %773 = vmatprep.subr.mxu0 0.0
    %774 = vmatpush2.msra.mxu0 0.0
    %775 = vmatprep.subr.mxu0 0.0
    %776 = vmatpush2.msra.mxu0 0.0
    %777 = vmatprep.subr.mxu0 0.0
    %778 = vmatpush2.msra.mxu0 0.0
    %779 = vmatprep.subr.mxu0 0.0
    %780 = vmatpush2.msra.mxu0 0.0
    %781 = vmatprep.subr.mxu0 0.0
    %782 = vmatpush2.msra.mxu0 0.0
    %783 = vmatprep.subr.mxu0 0.0
    %784 = vmatpush2.msra.mxu0 0.0
    %785 = vmatprep.subr.mxu0 0.0
    %786 = vmatpush2.msra.mxu0 0.0
    %787 = vmatprep.subr.mxu0 0.0
    %788 = vmatpush2.msra.mxu0 0.0
    %789 = vmatprep.subr.mxu0 0.0
    %790 = vmatpush2.msra.mxu0 0.0
    %791 = vmatprep.subr.mxu0 0.0
    %792 = vmatpush2.msra.mxu0 0.0
    %793 = vmatprep.subr.mxu0 0.0
    %794 = vmatpush2.msra.mxu0 0.0
    %795 = vmatprep.mubr.f32.mxu0 0.0
    %796 = vmatmul.mubr.f32.gmra.mxu0 %v729
    %v797 = vpop.f32.mrf.mxu0
    %v798 = vadd.f32 0.0, %v797
    %v799 = vpop.f32.mrf.mxu0
    %800 = vdwg.mxu0
    %v802 = vrot.slane %v798, 2
    %v804 = vadd.f32 %v175, %v802
    %v805 = vtanh.pop %v804
    %vm806 = vcmask 1041408
    %v807 = vsel %vm806, %v257, %v335
    %vm808 = vcmask 1043456
    %v809 = vsel %vm808, %v807, %v414
    %vm810 = vcmask 1045504
    %v811 = vsel %vm810, %v809, %v493
    %v812 = vsel %vm806, %v569, %v647
    %v813 = vsel %vm808, %v812, %v726
    %v814 = vsel %vm810, %v813, %v805
    %v815 = vld [vmem:[#allocation7] sm:$0xff]
    %v816 = vld [vmem:[#allocation7 + $0x8] sm:$0xff]
    %v817 = vld [vmem:[#allocation7 + $0x10] sm:$0xff]
    %v818 = vld [vmem:[#allocation7 + $0x18] sm:$0xff]
    %v820 = vsel %vm182, %v811, 0
    %v823 = vsel %vm182, %v814, 0
    %825 = vmatprep.subr.mxu0 0.0
    %826 = vmatpush1.msra.mxu0 0.0
    %827 = vmatprep.subr.mxu0 0.0
    %828 = vmatpush1.msra.mxu0 0.0
    %829 = vmatprep.subr.mxu0 0.0
    %830 = vmatpush1.msra.mxu0 0.0
    %831 = vmatprep.subr.mxu0 0.0
    %832 = vmatpush1.msra.mxu0 0.0
    %833 = vmatprep.subr.mxu0 0.0
    %834 = vmatpush1.msra.mxu0 0.0
    %835 = vmatprep.subr.mxu0 0.0
    %836 = vmatpush1.msra.mxu0 0.0
    %837 = vmatprep.subr.mxu0 0.0
    %838 = vmatpush1.msra.mxu0 0.0
    %839 = vmatprep.subr.mxu0 0.0
    %840 = vmatpush1.msra.mxu0 0.0
    %841 = vmatprep.subr.mxu0 0.0
    %842 = vmatpush1.msra.mxu0 0.0
    %843 = vmatprep.subr.mxu0 0.0
    %844 = vmatpush1.msra.mxu0 0.0
    %845 = vmatprep.subr.mxu0 0.0
    %846 = vmatpush1.msra.mxu0 0.0
    %847 = vmatprep.subr.mxu0 0.0
    %848 = vmatpush1.msra.mxu0 0.0
    %849 = vmatprep.subr.mxu0 0.0
    %850 = vmatpush1.msra.mxu0 %v818
    %851 = vmatprep.subr.mxu0 0.0
    %852 = vmatpush1.msra.mxu0 %v817
    %853 = vmatprep.subr.mxu0 0.0
    %854 = vmatpush1.msra.mxu0 %v816
    %855 = vmatprep.subr.mxu0 0.0
    %856 = vmatpush1.msra.mxu0 %v815
    %857 = vmatprep.subr.mxu0 0.0
    %858 = vmatpush2.msra.mxu0 0.0
    %859 = vmatprep.subr.mxu0 0.0
    %860 = vmatpush2.msra.mxu0 0.0
    %861 = vmatprep.subr.mxu0 0.0
    %862 = vmatpush2.msra.mxu0 0.0
    %863 = vmatprep.subr.mxu0 0.0
    %864 = vmatpush2.msra.mxu0 0.0
    %865 = vmatprep.subr.mxu0 0.0
    %866 = vmatpush2.msra.mxu0 0.0
    %867 = vmatprep.subr.mxu0 0.0
    %868 = vmatpush2.msra.mxu0 0.0
    %869 = vmatprep.subr.mxu0 0.0
    %870 = vmatpush2.msra.mxu0 0.0
    %871 = vmatprep.subr.mxu0 0.0
    %872 = vmatpush2.msra.mxu0 0.0
    %873 = vmatprep.subr.mxu0 0.0
    %874 = vmatpush2.msra.mxu0 0.0
    %875 = vmatprep.subr.mxu0 0.0
    %876 = vmatpush2.msra.mxu0 0.0
    %877 = vmatprep.subr.mxu0 0.0
    %878 = vmatpush2.msra.mxu0 0.0
    %879 = vmatprep.subr.mxu0 0.0
    %880 = vmatpush2.msra.mxu0 0.0
    %881 = vmatprep.subr.mxu0 0.0
    %882 = vmatpush2.msra.mxu0 0.0
    %883 = vmatprep.subr.mxu0 0.0
    %884 = vmatpush2.msra.mxu0 0.0
    %885 = vmatprep.subr.mxu0 0.0
    %886 = vmatpush2.msra.mxu0 0.0
    %887 = vmatprep.subr.mxu0 0.0
    %888 = vmatpush2.msra.mxu0 0.0
    %889 = vmatprep.mubr.f32.mxu0 0.0
    %890 = vmatmul.mubr.f32.gmra.mxu0 %v820
    %v891 = vpop.f32.mrf.mxu0
    %v892 = vadd.f32 0.0, %v891
    %v893 = vpop.f32.mrf.mxu0
    %894 = vmatprep.mubr.f32.mxu0 0.0
    %895 = vmatmul.mubr.f32.gmra.mxu0 %v823
    %v896 = vpop.f32.mrf.mxu0
    %v897 = vadd.f32 0.0, %v896
    %v898 = vpop.f32.mrf.mxu0
    %899 = vdwg.mxu0
    %s900 = scalar_lea.vmem [#allocation8], 32
    %v901 = vld [vmem:[%s900] sm:$0xff]
    %v902 = vld [vmem:[%s900 + $0x8] sm:$0xff]
    %v903 = vld [vmem:[%s900 + $0x10] sm:$0xff]
    %v904 = vld [vmem:[%s900 + $0x18] sm:$0xff]
    %905 = vmatprep.subr.mxu0 0.0
    %906 = vmatpush1.msra.mxu0 0.0
    %907 = vmatprep.subr.mxu0 0.0
    %908 = vmatpush1.msra.mxu0 0.0
    %909 = vmatprep.subr.mxu0 0.0
    %910 = vmatpush1.msra.mxu0 0.0
    %911 = vmatprep.subr.mxu0 0.0
    %912 = vmatpush1.msra.mxu0 0.0
    %913 = vmatprep.subr.mxu0 0.0
    %914 = vmatpush1.msra.mxu0 0.0
    %915 = vmatprep.subr.mxu0 0.0
    %916 = vmatpush1.msra.mxu0 0.0
    %917 = vmatprep.subr.mxu0 0.0
    %918 = vmatpush1.msra.mxu0 0.0
    %919 = vmatprep.subr.mxu0 0.0
    %920 = vmatpush1.msra.mxu0 0.0
    %921 = vmatprep.subr.mxu0 0.0
    %922 = vmatpush1.msra.mxu0 0.0
    %923 = vmatprep.subr.mxu0 0.0
    %924 = vmatpush1.msra.mxu0 0.0
    %925 = vmatprep.subr.mxu0 0.0
    %926 = vmatpush1.msra.mxu0 0.0
    %927 = vmatprep.subr.mxu0 0.0
    %928 = vmatpush1.msra.mxu0 0.0
    %929 = vmatprep.subr.mxu0 0.0
    %930 = vmatpush1.msra.mxu0 %v904
    %931 = vmatprep.subr.mxu0 0.0
    %932 = vmatpush1.msra.mxu0 %v903
    %933 = vmatprep.subr.mxu0 0.0
    %934 = vmatpush1.msra.mxu0 %v902
    %935 = vmatprep.subr.mxu0 0.0
    %936 = vmatpush1.msra.mxu0 %v901
    %937 = vmatprep.subr.mxu0 0.0
    %938 = vmatpush2.msra.mxu0 0.0
    %939 = vmatprep.subr.mxu0 0.0
    %940 = vmatpush2.msra.mxu0 0.0
    %941 = vmatprep.subr.mxu0 0.0
    %942 = vmatpush2.msra.mxu0 0.0
    %943 = vmatprep.subr.mxu0 0.0
    %944 = vmatpush2.msra.mxu0 0.0
    %945 = vmatprep.subr.mxu0 0.0
    %946 = vmatpush2.msra.mxu0 0.0
    %947 = vmatprep.subr.mxu0 0.0
    %948 = vmatpush2.msra.mxu0 0.0
    %949 = vmatprep.subr.mxu0 0.0
    %950 = vmatpush2.msra.mxu0 0.0
    %951 = vmatprep.subr.mxu0 0.0
    %952 = vmatpush2.msra.mxu0 0.0
    %953 = vmatprep.subr.mxu0 0.0
    %954 = vmatpush2.msra.mxu0 0.0
    %955 = vmatprep.subr.mxu0 0.0
    %956 = vmatpush2.msra.mxu0 0.0
    %957 = vmatprep.subr.mxu0 0.0
    %958 = vmatpush2.msra.mxu0 0.0
    %959 = vmatprep.subr.mxu0 0.0
    %960 = vmatpush2.msra.mxu0 0.0
    %961 = vmatprep.subr.mxu0 0.0
    %962 = vmatpush2.msra.mxu0 0.0
    %963 = vmatprep.subr.mxu0 0.0
    %964 = vmatpush2.msra.mxu0 0.0
    %965 = vmatprep.subr.mxu0 0.0
    %966 = vmatpush2.msra.mxu0 0.0
    %967 = vmatprep.subr.mxu0 0.0
    %968 = vmatpush2.msra.mxu0 0.0
    %969 = vmatprep.mubr.f32.mxu0 0.0
    %970 = vmatmul.mubr.f32.gmra.mxu0 %v184
    %v971 = vpop.f32.mrf.mxu0
    %v972 = vadd.f32 0.0, %v971
    %v973 = vpop.f32.mrf.mxu0
    %974 = vdwg.mxu0
    %v975 = vadd.f32 %v892, %v972
    %v976 = vtanh.pop %v975
    %v978 = vsel %vm182, %v976, 0
    %980 = vmatprep.subr.mxu0 0.0
    %981 = vmatpush1.msra.mxu0 0.0
    %982 = vmatprep.subr.mxu0 0.0
    %983 = vmatpush1.msra.mxu0 0.0
    %984 = vmatprep.subr.mxu0 0.0
    %985 = vmatpush1.msra.mxu0 0.0
    %986 = vmatprep.subr.mxu0 0.0
    %987 = vmatpush1.msra.mxu0 0.0
    %988 = vmatprep.subr.mxu0 0.0
    %989 = vmatpush1.msra.mxu0 0.0
    %990 = vmatprep.subr.mxu0 0.0
    %991 = vmatpush1.msra.mxu0 0.0
    %992 = vmatprep.subr.mxu0 0.0
    %993 = vmatpush1.msra.mxu0 0.0
    %994 = vmatprep.subr.mxu0 0.0
    %995 = vmatpush1.msra.mxu0 0.0
    %996 = vmatprep.subr.mxu0 0.0
    %997 = vmatpush1.msra.mxu0 0.0
    %998 = vmatprep.subr.mxu0 0.0
    %999 = vmatpush1.msra.mxu0 0.0
    %1000 = vmatprep.subr.mxu0 0.0
    %1001 = vmatpush1.msra.mxu0 0.0
    %1002 = vmatprep.subr.mxu0 0.0
    %1003 = vmatpush1.msra.mxu0 0.0
    %1004 = vmatprep.subr.mxu0 0.0
    %1005 = vmatpush1.msra.mxu0 %v904
    %1006 = vmatprep.subr.mxu0 0.0
    %1007 = vmatpush1.msra.mxu0 %v903
    %1008 = vmatprep.subr.mxu0 0.0
    %1009 = vmatpush1.msra.mxu0 %v902
    %1010 = vmatprep.subr.mxu0 0.0
    %1011 = vmatpush1.msra.mxu0 %v901
    %1012 = vmatprep.subr.mxu0 0.0
    %1013 = vmatpush2.msra.mxu0 0.0
    %1014 = vmatprep.subr.mxu0 0.0
    %1015 = vmatpush2.msra.mxu0 0.0
    %1016 = vmatprep.subr.mxu0 0.0
    %1017 = vmatpush2.msra.mxu0 0.0
    %1018 = vmatprep.subr.mxu0 0.0
    %1019 = vmatpush2.msra.mxu0 0.0
    %1020 = vmatprep.subr.mxu0 0.0
    %1021 = vmatpush2.msra.mxu0 0.0
    %1022 = vmatprep.subr.mxu0 0.0
    %1023 = vmatpush2.msra.mxu0 0.0
    %1024 = vmatprep.subr.mxu0 0.0
    %1025 = vmatpush2.msra.mxu0 0.0
    %1026 = vmatprep.subr.mxu0 0.0
    %1027 = vmatpush2.msra.mxu0 0.0
    %1028 = vmatprep.subr.mxu0 0.0
    %1029 = vmatpush2.msra.mxu0 0.0
    %1030 = vmatprep.subr.mxu0 0.0
    %1031 = vmatpush2.msra.mxu0 0.0
    %1032 = vmatprep.subr.mxu0 0.0
    %1033 = vmatpush2.msra.mxu0 0.0
    %1034 = vmatprep.subr.mxu0 0.0
    %1035 = vmatpush2.msra.mxu0 0.0
    %1036 = vmatprep.subr.mxu0 0.0
    %1037 = vmatpush2.msra.mxu0 0.0
    %1038 = vmatprep.subr.mxu0 0.0
    %1039 = vmatpush2.msra.mxu0 0.0
    %1040 = vmatprep.subr.mxu0 0.0
    %1041 = vmatpush2.msra.mxu0 0.0
    %1042 = vmatprep.subr.mxu0 0.0
    %1043 = vmatpush2.msra.mxu0 0.0
    %1044 = vmatprep.mubr.f32.mxu0 0.0
    %1045 = vmatmul.mubr.f32.gmra.mxu0 %v978
    %v1046 = vpop.f32.mrf.mxu0
    %v1047 = vadd.f32 0.0, %v1046
    %v1048 = vpop.f32.mrf.mxu0
    %1049 = vdwg.mxu0
    %v1051 = vrot.slane %v1047, 6
    %v1053 = vadd.f32 %v892, %v1051
    %v1054 = vtanh.pop %v1053
    %v1056 = vrot.slane %v1054, 2
    %v1057 = vsel %vm182, %v1056, 0
    %1059 = vmatprep.subr.mxu0 0.0
    %1060 = vmatpush1.msra.mxu0 0.0
    %1061 = vmatprep.subr.mxu0 0.0
    %1062 = vmatpush1.msra.mxu0 0.0
    %1063 = vmatprep.subr.mxu0 0.0
    %1064 = vmatpush1.msra.mxu0 0.0
    %1065 = vmatprep.subr.mxu0 0.0
    %1066 = vmatpush1.msra.mxu0 0.0
    %1067 = vmatprep.subr.mxu0 0.0
    %1068 = vmatpush1.msra.mxu0 0.0
    %1069 = vmatprep.subr.mxu0 0.0
    %1070 = vmatpush1.msra.mxu0 0.0
    %1071 = vmatprep.subr.mxu0 0.0
    %1072 = vmatpush1.msra.mxu0 0.0
    %1073 = vmatprep.subr.mxu0 0.0
    %1074 = vmatpush1.msra.mxu0 0.0
    %1075 = vmatprep.subr.mxu0 0.0
    %1076 = vmatpush1.msra.mxu0 0.0
    %1077 = vmatprep.subr.mxu0 0.0
    %1078 = vmatpush1.msra.mxu0 0.0
    %1079 = vmatprep.subr.mxu0 0.0
    %1080 = vmatpush1.msra.mxu0 0.0
    %1081 = vmatprep.subr.mxu0 0.0
    %1082 = vmatpush1.msra.mxu0 0.0
    %1083 = vmatprep.subr.mxu0 0.0
    %1084 = vmatpush1.msra.mxu0 %v904
    %1085 = vmatprep.subr.mxu0 0.0
    %1086 = vmatpush1.msra.mxu0 %v903
    %1087 = vmatprep.subr.mxu0 0.0
    %1088 = vmatpush1.msra.mxu0 %v902
    %1089 = vmatprep.subr.mxu0 0.0
    %1090 = vmatpush1.msra.mxu0 %v901
    %1091 = vmatprep.subr.mxu0 0.0
    %1092 = vmatpush2.msra.mxu0 0.0
    %1093 = vmatprep.subr.mxu0 0.0
    %1094 = vmatpush2.msra.mxu0 0.0
    %1095 = vmatprep.subr.mxu0 0.0
    %1096 = vmatpush2.msra.mxu0 0.0
    %1097 = vmatprep.subr.mxu0 0.0
    %1098 = vmatpush2.msra.mxu0 0.0
    %1099 = vmatprep.subr.mxu0 0.0
    %1100 = vmatpush2.msra.mxu0 0.0
    %1101 = vmatprep.subr.mxu0 0.0
    %1102 = vmatpush2.msra.mxu0 0.0
    %1103 = vmatprep.subr.mxu0 0.0
    %1104 = vmatpush2.msra.mxu0 0.0
    %1105 = vmatprep.subr.mxu0 0.0
    %1106 = vmatpush2.msra.mxu0 0.0
    %1107 = vmatprep.subr.mxu0 0.0
    %1108 = vmatpush2.msra.mxu0 0.0
    %1109 = vmatprep.subr.mxu0 0.0
    %1110 = vmatpush2.msra.mxu0 0.0
    %1111 = vmatprep.subr.mxu0 0.0
    %1112 = vmatpush2.msra.mxu0 0.0
    %1113 = vmatprep.subr.mxu0 0.0
    %1114 = vmatpush2.msra.mxu0 0.0
    %1115 = vmatprep.subr.mxu0 0.0
    %1116 = vmatpush2.msra.mxu0 0.0
    %1117 = vmatprep.subr.mxu0 0.0
    %1118 = vmatpush2.msra.mxu0 0.0
    %1119 = vmatprep.subr.mxu0 0.0
    %1120 = vmatpush2.msra.mxu0 0.0
    %1121 = vmatprep.subr.mxu0 0.0
    %1122 = vmatpush2.msra.mxu0 0.0
    %1123 = vmatprep.mubr.f32.mxu0 0.0
    %1124 = vmatmul.mubr.f32.gmra.mxu0 %v1057
    %v1125 = vpop.f32.mrf.mxu0
    %v1126 = vadd.f32 0.0, %v1125
    %v1127 = vpop.f32.mrf.mxu0
    %1128 = vdwg.mxu0
    %v1130 = vrot.slane %v1126, 4
    %v1132 = vadd.f32 %v892, %v1130
    %v1133 = vtanh.pop %v1132
    %v1135 = vrot.slane %v1133, 4
    %v1136 = vsel %vm182, %v1135, 0
    %1138 = vmatprep.subr.mxu0 0.0
    %1139 = vmatpush1.msra.mxu0 0.0
    %1140 = vmatprep.subr.mxu0 0.0
    %1141 = vmatpush1.msra.mxu0 0.0
    %1142 = vmatprep.subr.mxu0 0.0
    %1143 = vmatpush1.msra.mxu0 0.0
    %1144 = vmatprep.subr.mxu0 0.0
    %1145 = vmatpush1.msra.mxu0 0.0
    %1146 = vmatprep.subr.mxu0 0.0
    %1147 = vmatpush1.msra.mxu0 0.0
    %1148 = vmatprep.subr.mxu0 0.0
    %1149 = vmatpush1.msra.mxu0 0.0
    %1150 = vmatprep.subr.mxu0 0.0
    %1151 = vmatpush1.msra.mxu0 0.0
    %1152 = vmatprep.subr.mxu0 0.0
    %1153 = vmatpush1.msra.mxu0 0.0
    %1154 = vmatprep.subr.mxu0 0.0
    %1155 = vmatpush1.msra.mxu0 0.0
    %1156 = vmatprep.subr.mxu0 0.0
    %1157 = vmatpush1.msra.mxu0 0.0
    %1158 = vmatprep.subr.mxu0 0.0
    %1159 = vmatpush1.msra.mxu0 0.0
    %1160 = vmatprep.subr.mxu0 0.0
    %1161 = vmatpush1.msra.mxu0 0.0
    %1162 = vmatprep.subr.mxu0 0.0
    %1163 = vmatpush1.msra.mxu0 %v904
    %1164 = vmatprep.subr.mxu0 0.0
    %1165 = vmatpush1.msra.mxu0 %v903
    %1166 = vmatprep.subr.mxu0 0.0
    %1167 = vmatpush1.msra.mxu0 %v902
    %1168 = vmatprep.subr.mxu0 0.0
    %1169 = vmatpush1.msra.mxu0 %v901
    %1170 = vmatprep.subr.mxu0 0.0
    %1171 = vmatpush2.msra.mxu0 0.0
    %1172 = vmatprep.subr.mxu0 0.0
    %1173 = vmatpush2.msra.mxu0 0.0
    %1174 = vmatprep.subr.mxu0 0.0
    %1175 = vmatpush2.msra.mxu0 0.0
    %1176 = vmatprep.subr.mxu0 0.0
    %1177 = vmatpush2.msra.mxu0 0.0
    %1178 = vmatprep.subr.mxu0 0.0
    %1179 = vmatpush2.msra.mxu0 0.0
    %1180 = vmatprep.subr.mxu0 0.0
    %1181 = vmatpush2.msra.mxu0 0.0
    %1182 = vmatprep.subr.mxu0 0.0
    %1183 = vmatpush2.msra.mxu0 0.0
    %1184 = vmatprep.subr.mxu0 0.0
    %1185 = vmatpush2.msra.mxu0 0.0
    %1186 = vmatprep.subr.mxu0 0.0
    %1187 = vmatpush2.msra.mxu0 0.0
    %1188 = vmatprep.subr.mxu0 0.0
    %1189 = vmatpush2.msra.mxu0 0.0
    %1190 = vmatprep.subr.mxu0 0.0
    %1191 = vmatpush2.msra.mxu0 0.0
    %1192 = vmatprep.subr.mxu0 0.0
    %1193 = vmatpush2.msra.mxu0 0.0
    %1194 = vmatprep.subr.mxu0 0.0
    %1195 = vmatpush2.msra.mxu0 0.0
    %1196 = vmatprep.subr.mxu0 0.0
    %1197 = vmatpush2.msra.mxu0 0.0
    %1198 = vmatprep.subr.mxu0 0.0
    %1199 = vmatpush2.msra.mxu0 0.0
    %1200 = vmatprep.subr.mxu0 0.0
    %1201 = vmatpush2.msra.mxu0 0.0
    %1202 = vmatprep.mubr.f32.mxu0 0.0
    %1203 = vmatmul.mubr.f32.gmra.mxu0 %v1136
    %v1204 = vpop.f32.mrf.mxu0
    %v1205 = vadd.f32 0.0, %v1204
    %v1206 = vpop.f32.mrf.mxu0
    %1207 = vdwg.mxu0
    %v1209 = vrot.slane %v1205, 2
    %v1211 = vadd.f32 %v892, %v1209
    %v1212 = vtanh.pop %v1211
    %v1214 = vrot.slane %v1212, 6
    %v1215 = vsel %vm182, %v1214, 0
    %1217 = vmatprep.subr.mxu0 0.0
    %1218 = vmatpush1.msra.mxu0 0.0
    %1219 = vmatprep.subr.mxu0 0.0
    %1220 = vmatpush1.msra.mxu0 0.0
    %1221 = vmatprep.subr.mxu0 0.0
    %1222 = vmatpush1.msra.mxu0 0.0
    %1223 = vmatprep.subr.mxu0 0.0
    %1224 = vmatpush1.msra.mxu0 0.0
    %1225 = vmatprep.subr.mxu0 0.0
    %1226 = vmatpush1.msra.mxu0 0.0
    %1227 = vmatprep.subr.mxu0 0.0
    %1228 = vmatpush1.msra.mxu0 0.0
    %1229 = vmatprep.subr.mxu0 0.0
    %1230 = vmatpush1.msra.mxu0 0.0
    %1231 = vmatprep.subr.mxu0 0.0
    %1232 = vmatpush1.msra.mxu0 0.0
    %1233 = vmatprep.subr.mxu0 0.0
    %1234 = vmatpush1.msra.mxu0 0.0
    %1235 = vmatprep.subr.mxu0 0.0
    %1236 = vmatpush1.msra.mxu0 0.0
    %1237 = vmatprep.subr.mxu0 0.0
    %1238 = vmatpush1.msra.mxu0 0.0
    %1239 = vmatprep.subr.mxu0 0.0
    %1240 = vmatpush1.msra.mxu0 0.0
    %1241 = vmatprep.subr.mxu0 0.0
    %1242 = vmatpush1.msra.mxu0 %v904
    %1243 = vmatprep.subr.mxu0 0.0
    %1244 = vmatpush1.msra.mxu0 %v903
    %1245 = vmatprep.subr.mxu0 0.0
    %1246 = vmatpush1.msra.mxu0 %v902
    %1247 = vmatprep.subr.mxu0 0.0
    %1248 = vmatpush1.msra.mxu0 %v901
    %1249 = vmatprep.subr.mxu0 0.0
    %1250 = vmatpush2.msra.mxu0 0.0
    %1251 = vmatprep.subr.mxu0 0.0
    %1252 = vmatpush2.msra.mxu0 0.0
    %1253 = vmatprep.subr.mxu0 0.0
    %1254 = vmatpush2.msra.mxu0 0.0
    %1255 = vmatprep.subr.mxu0 0.0
    %1256 = vmatpush2.msra.mxu0 0.0
    %1257 = vmatprep.subr.mxu0 0.0
    %1258 = vmatpush2.msra.mxu0 0.0
    %1259 = vmatprep.subr.mxu0 0.0
    %1260 = vmatpush2.msra.mxu0 0.0
    %1261 = vmatprep.subr.mxu0 0.0
    %1262 = vmatpush2.msra.mxu0 0.0
    %1263 = vmatprep.subr.mxu0 0.0
    %1264 = vmatpush2.msra.mxu0 0.0
    %1265 = vmatprep.subr.mxu0 0.0
    %1266 = vmatpush2.msra.mxu0 0.0
    %1267 = vmatprep.subr.mxu0 0.0
    %1268 = vmatpush2.msra.mxu0 0.0
    %1269 = vmatprep.subr.mxu0 0.0
    %1270 = vmatpush2.msra.mxu0 0.0
    %1271 = vmatprep.subr.mxu0 0.0
    %1272 = vmatpush2.msra.mxu0 0.0
    %1273 = vmatprep.subr.mxu0 0.0
    %1274 = vmatpush2.msra.mxu0 0.0
    %1275 = vmatprep.subr.mxu0 0.0
    %1276 = vmatpush2.msra.mxu0 0.0
    %1277 = vmatprep.subr.mxu0 0.0
    %1278 = vmatpush2.msra.mxu0 0.0
    %1279 = vmatprep.subr.mxu0 0.0
    %1280 = vmatpush2.msra.mxu0 0.0
    %1281 = vmatprep.mubr.f32.mxu0 0.0
    %1282 = vmatmul.mubr.f32.gmra.mxu0 %v1215
    %v1283 = vpop.f32.mrf.mxu0
    %v1284 = vadd.f32 0.0, %v1283
    %v1285 = vpop.f32.mrf.mxu0
    %1286 = vdwg.mxu0
    %v1287 = vadd.f32 %v897, %v1284
    %v1288 = vtanh.pop %v1287
    %v1290 = vsel %vm182, %v1288, 0
    %1292 = vmatprep.subr.mxu0 0.0
    %1293 = vmatpush1.msra.mxu0 0.0
    %1294 = vmatprep.subr.mxu0 0.0
    %1295 = vmatpush1.msra.mxu0 0.0
    %1296 = vmatprep.subr.mxu0 0.0
    %1297 = vmatpush1.msra.mxu0 0.0
    %1298 = vmatprep.subr.mxu0 0.0
    %1299 = vmatpush1.msra.mxu0 0.0
    %1300 = vmatprep.subr.mxu0 0.0
    %1301 = vmatpush1.msra.mxu0 0.0
    %1302 = vmatprep.subr.mxu0 0.0
    %1303 = vmatpush1.msra.mxu0 0.0
    %1304 = vmatprep.subr.mxu0 0.0
    %1305 = vmatpush1.msra.mxu0 0.0
    %1306 = vmatprep.subr.mxu0 0.0
    %1307 = vmatpush1.msra.mxu0 0.0
    %1308 = vmatprep.subr.mxu0 0.0
    %1309 = vmatpush1.msra.mxu0 0.0
    %1310 = vmatprep.subr.mxu0 0.0
    %1311 = vmatpush1.msra.mxu0 0.0
    %1312 = vmatprep.subr.mxu0 0.0
    %1313 = vmatpush1.msra.mxu0 0.0
    %1314 = vmatprep.subr.mxu0 0.0
    %1315 = vmatpush1.msra.mxu0 0.0
    %1316 = vmatprep.subr.mxu0 0.0
    %1317 = vmatpush1.msra.mxu0 %v904
    %1318 = vmatprep.subr.mxu0 0.0
    %1319 = vmatpush1.msra.mxu0 %v903
    %1320 = vmatprep.subr.mxu0 0.0
    %1321 = vmatpush1.msra.mxu0 %v902
    %1322 = vmatprep.subr.mxu0 0.0
    %1323 = vmatpush1.msra.mxu0 %v901
    %1324 = vmatprep.subr.mxu0 0.0
    %1325 = vmatpush2.msra.mxu0 0.0
    %1326 = vmatprep.subr.mxu0 0.0
    %1327 = vmatpush2.msra.mxu0 0.0
    %1328 = vmatprep.subr.mxu0 0.0
    %1329 = vmatpush2.msra.mxu0 0.0
    %1330 = vmatprep.subr.mxu0 0.0
    %1331 = vmatpush2.msra.mxu0 0.0
    %1332 = vmatprep.subr.mxu0 0.0
    %1333 = vmatpush2.msra.mxu0 0.0
    %1334 = vmatprep.subr.mxu0 0.0
    %1335 = vmatpush2.msra.mxu0 0.0
    %1336 = vmatprep.subr.mxu0 0.0
    %1337 = vmatpush2.msra.mxu0 0.0
    %1338 = vmatprep.subr.mxu0 0.0
    %1339 = vmatpush2.msra.mxu0 0.0
    %1340 = vmatprep.subr.mxu0 0.0
    %1341 = vmatpush2.msra.mxu0 0.0
    %1342 = vmatprep.subr.mxu0 0.0
    %1343 = vmatpush2.msra.mxu0 0.0
    %1344 = vmatprep.subr.mxu0 0.0
    %1345 = vmatpush2.msra.mxu0 0.0
    %1346 = vmatprep.subr.mxu0 0.0
    %1347 = vmatpush2.msra.mxu0 0.0
    %1348 = vmatprep.subr.mxu0 0.0
    %1349 = vmatpush2.msra.mxu0 0.0
    %1350 = vmatprep.subr.mxu0 0.0
    %1351 = vmatpush2.msra.mxu0 0.0
    %1352 = vmatprep.subr.mxu0 0.0
    %1353 = vmatpush2.msra.mxu0 0.0
    %1354 = vmatprep.subr.mxu0 0.0
    %1355 = vmatpush2.msra.mxu0 0.0
    %1356 = vmatprep.mubr.f32.mxu0 0.0
    %1357 = vmatmul.mubr.f32.gmra.mxu0 %v1290
    %v1358 = vpop.f32.mrf.mxu0
    %v1359 = vadd.f32 0.0, %v1358
    %v1360 = vpop.f32.mrf.mxu0
    %1361 = vdwg.mxu0
    %v1363 = vrot.slane %v1359, 6
    %v1365 = vadd.f32 %v897, %v1363
    %v1366 = vtanh.pop %v1365
    %v1368 = vrot.slane %v1366, 2
    %v1369 = vsel %vm182, %v1368, 0
    %1371 = vmatprep.subr.mxu0 0.0
    %1372 = vmatpush1.msra.mxu0 0.0
    %1373 = vmatprep.subr.mxu0 0.0
    %1374 = vmatpush1.msra.mxu0 0.0
    %1375 = vmatprep.subr.mxu0 0.0
    %1376 = vmatpush1.msra.mxu0 0.0
    %1377 = vmatprep.subr.mxu0 0.0
    %1378 = vmatpush1.msra.mxu0 0.0
    %1379 = vmatprep.subr.mxu0 0.0
    %1380 = vmatpush1.msra.mxu0 0.0
    %1381 = vmatprep.subr.mxu0 0.0
    %1382 = vmatpush1.msra.mxu0 0.0
    %1383 = vmatprep.subr.mxu0 0.0
    %1384 = vmatpush1.msra.mxu0 0.0
    %1385 = vmatprep.subr.mxu0 0.0
    %1386 = vmatpush1.msra.mxu0 0.0
    %1387 = vmatprep.subr.mxu0 0.0
    %1388 = vmatpush1.msra.mxu0 0.0
    %1389 = vmatprep.subr.mxu0 0.0
    %1390 = vmatpush1.msra.mxu0 0.0
    %1391 = vmatprep.subr.mxu0 0.0
    %1392 = vmatpush1.msra.mxu0 0.0
    %1393 = vmatprep.subr.mxu0 0.0
    %1394 = vmatpush1.msra.mxu0 0.0
    %1395 = vmatprep.subr.mxu0 0.0
    %1396 = vmatpush1.msra.mxu0 %v904
    %1397 = vmatprep.subr.mxu0 0.0
    %1398 = vmatpush1.msra.mxu0 %v903
    %1399 = vmatprep.subr.mxu0 0.0
    %1400 = vmatpush1.msra.mxu0 %v902
    %1401 = vmatprep.subr.mxu0 0.0
    %1402 = vmatpush1.msra.mxu0 %v901
    %1403 = vmatprep.subr.mxu0 0.0
    %1404 = vmatpush2.msra.mxu0 0.0
    %1405 = vmatprep.subr.mxu0 0.0
    %1406 = vmatpush2.msra.mxu0 0.0
    %1407 = vmatprep.subr.mxu0 0.0
    %1408 = vmatpush2.msra.mxu0 0.0
    %1409 = vmatprep.subr.mxu0 0.0
    %1410 = vmatpush2.msra.mxu0 0.0
    %1411 = vmatprep.subr.mxu0 0.0
    %1412 = vmatpush2.msra.mxu0 0.0
    %1413 = vmatprep.subr.mxu0 0.0
    %1414 = vmatpush2.msra.mxu0 0.0
    %1415 = vmatprep.subr.mxu0 0.0
    %1416 = vmatpush2.msra.mxu0 0.0
    %1417 = vmatprep.subr.mxu0 0.0
    %1418 = vmatpush2.msra.mxu0 0.0
    %1419 = vmatprep.subr.mxu0 0.0
    %1420 = vmatpush2.msra.mxu0 0.0
    %1421 = vmatprep.subr.mxu0 0.0
    %1422 = vmatpush2.msra.mxu0 0.0
    %1423 = vmatprep.subr.mxu0 0.0
    %1424 = vmatpush2.msra.mxu0 0.0
    %1425 = vmatprep.subr.mxu0 0.0
    %1426 = vmatpush2.msra.mxu0 0.0
    %1427 = vmatprep.subr.mxu0 0.0
    %1428 = vmatpush2.msra.mxu0 0.0
    %1429 = vmatprep.subr.mxu0 0.0
    %1430 = vmatpush2.msra.mxu0 0.0
    %1431 = vmatprep.subr.mxu0 0.0
    %1432 = vmatpush2.msra.mxu0 0.0
    %1433 = vmatprep.subr.mxu0 0.0
    %1434 = vmatpush2.msra.mxu0 0.0
    %1435 = vmatprep.mubr.f32.mxu0 0.0
    %1436 = vmatmul.mubr.f32.gmra.mxu0 %v1369
    %v1437 = vpop.f32.mrf.mxu0
    %v1438 = vadd.f32 0.0, %v1437
    %v1439 = vpop.f32.mrf.mxu0
    %1440 = vdwg.mxu0
    %v1442 = vrot.slane %v1438, 4
    %v1444 = vadd.f32 %v897, %v1442
    %v1445 = vtanh.pop %v1444
    %v1447 = vrot.slane %v1445, 4
    %v1448 = vsel %vm182, %v1447, 0
    %1450 = vmatprep.subr.mxu0 0.0
    %1451 = vmatpush1.msra.mxu0 0.0
    %1452 = vmatprep.subr.mxu0 0.0
    %1453 = vmatpush1.msra.mxu0 0.0
    %1454 = vmatprep.subr.mxu0 0.0
    %1455 = vmatpush1.msra.mxu0 0.0
    %1456 = vmatprep.subr.mxu0 0.0
    %1457 = vmatpush1.msra.mxu0 0.0
    %1458 = vmatprep.subr.mxu0 0.0
    %1459 = vmatpush1.msra.mxu0 0.0
    %1460 = vmatprep.subr.mxu0 0.0
    %1461 = vmatpush1.msra.mxu0 0.0
    %1462 = vmatprep.subr.mxu0 0.0
    %1463 = vmatpush1.msra.mxu0 0.0
    %1464 = vmatprep.subr.mxu0 0.0
    %1465 = vmatpush1.msra.mxu0 0.0
    %1466 = vmatprep.subr.mxu0 0.0
    %1467 = vmatpush1.msra.mxu0 0.0
    %1468 = vmatprep.subr.mxu0 0.0
    %1469 = vmatpush1.msra.mxu0 0.0
    %1470 = vmatprep.subr.mxu0 0.0
    %1471 = vmatpush1.msra.mxu0 0.0
    %1472 = vmatprep.subr.mxu0 0.0
    %1473 = vmatpush1.msra.mxu0 0.0
    %1474 = vmatprep.subr.mxu0 0.0
    %1475 = vmatpush1.msra.mxu0 %v904
    %1476 = vmatprep.subr.mxu0 0.0
    %1477 = vmatpush1.msra.mxu0 %v903
    %1478 = vmatprep.subr.mxu0 0.0
    %1479 = vmatpush1.msra.mxu0 %v902
    %1480 = vmatprep.subr.mxu0 0.0
    %1481 = vmatpush1.msra.mxu0 %v901
    %1482 = vmatprep.subr.mxu0 0.0
    %1483 = vmatpush2.msra.mxu0 0.0
    %1484 = vmatprep.subr.mxu0 0.0
    %1485 = vmatpush2.msra.mxu0 0.0
    %1486 = vmatprep.subr.mxu0 0.0
    %1487 = vmatpush2.msra.mxu0 0.0
    %1488 = vmatprep.subr.mxu0 0.0
    %1489 = vmatpush2.msra.mxu0 0.0
    %1490 = vmatprep.subr.mxu0 0.0
    %1491 = vmatpush2.msra.mxu0 0.0
    %1492 = vmatprep.subr.mxu0 0.0
    %1493 = vmatpush2.msra.mxu0 0.0
    %1494 = vmatprep.subr.mxu0 0.0
    %1495 = vmatpush2.msra.mxu0 0.0
    %1496 = vmatprep.subr.mxu0 0.0
    %1497 = vmatpush2.msra.mxu0 0.0
    %1498 = vmatprep.subr.mxu0 0.0
    %1499 = vmatpush2.msra.mxu0 0.0
    %1500 = vmatprep.subr.mxu0 0.0
    %1501 = vmatpush2.msra.mxu0 0.0
    %1502 = vmatprep.subr.mxu0 0.0
    %1503 = vmatpush2.msra.mxu0 0.0
    %1504 = vmatprep.subr.mxu0 0.0
    %1505 = vmatpush2.msra.mxu0 0.0
    %1506 = vmatprep.subr.mxu0 0.0
    %1507 = vmatpush2.msra.mxu0 0.0
    %1508 = vmatprep.subr.mxu0 0.0
    %1509 = vmatpush2.msra.mxu0 0.0
    %1510 = vmatprep.subr.mxu0 0.0
    %1511 = vmatpush2.msra.mxu0 0.0
    %1512 = vmatprep.subr.mxu0 0.0
    %1513 = vmatpush2.msra.mxu0 0.0
    %1514 = vmatprep.mubr.f32.mxu0 0.0
    %1515 = vmatmul.mubr.f32.gmra.mxu0 %v1448
    %v1516 = vpop.f32.mrf.mxu0
    %v1517 = vadd.f32 0.0, %v1516
    %v1518 = vpop.f32.mrf.mxu0
    %1519 = vdwg.mxu0
    %v1521 = vrot.slane %v1517, 2
    %v1523 = vadd.f32 %v897, %v1521
    %v1524 = vtanh.pop %v1523
    %v1525 = vld [vmem:[#allocation10] sm:$0xff]
    %v1526 = vld [vmem:[#allocation10 + $0x8] sm:$0xff]
    %v1527 = vld [vmem:[#allocation10 + $0x10] sm:$0xff]
    %v1528 = vld [vmem:[#allocation10 + $0x18] sm:$0xff]
    %v1529 = vld [vmem:[%s5] sm:$0x1]
    %v1531 = vlaneseq
    %v1532 = vshrl.u32 %v1531, 7
    %v1533 = vsub.s32 0, %v1532
    %v1534 = vrot.slane %v1529, %v1533
    %v1537 = vrot.slane %v1524, 6
    %v1538 = vsel %vm182, %v1537, 0
    %1540 = vmatprep.subr.mxu0 0.0
    %1541 = vmatpush1.msra.mxu0 0.0
    %1542 = vmatprep.subr.mxu0 0.0
    %1543 = vmatpush1.msra.mxu0 0.0
    %1544 = vmatprep.subr.mxu0 0.0
    %1545 = vmatpush1.msra.mxu0 0.0
    %1546 = vmatprep.subr.mxu0 0.0
    %1547 = vmatpush1.msra.mxu0 0.0
    %1548 = vmatprep.subr.mxu0 0.0
    %1549 = vmatpush1.msra.mxu0 0.0
    %1550 = vmatprep.subr.mxu0 0.0
    %1551 = vmatpush1.msra.mxu0 0.0
    %1552 = vmatprep.subr.mxu0 0.0
    %1553 = vmatpush1.msra.mxu0 0.0
    %1554 = vmatprep.subr.mxu0 0.0
    %1555 = vmatpush1.msra.mxu0 0.0
    %1556 = vmatprep.subr.mxu0 0.0
    %1557 = vmatpush1.msra.mxu0 0.0
    %1558 = vmatprep.subr.mxu0 0.0
    %1559 = vmatpush1.msra.mxu0 0.0
    %1560 = vmatprep.subr.mxu0 0.0
    %1561 = vmatpush1.msra.mxu0 0.0
    %1562 = vmatprep.subr.mxu0 0.0
    %1563 = vmatpush1.msra.mxu0 0.0
    %1564 = vmatprep.subr.mxu0 0.0
    %1565 = vmatpush1.msra.mxu0 %v1528
    %1566 = vmatprep.subr.mxu0 0.0
    %1567 = vmatpush1.msra.mxu0 %v1527
    %1568 = vmatprep.subr.mxu0 0.0
    %1569 = vmatpush1.msra.mxu0 %v1526
    %1570 = vmatprep.subr.mxu0 0.0
    %1571 = vmatpush1.msra.mxu0 %v1525
    %1572 = vmatprep.subr.mxu0 0.0
    %1573 = vmatpush2.msra.mxu0 0.0
    %1574 = vmatprep.subr.mxu0 0.0
    %1575 = vmatpush2.msra.mxu0 0.0
    %1576 = vmatprep.subr.mxu0 0.0
    %1577 = vmatpush2.msra.mxu0 0.0
    %1578 = vmatprep.subr.mxu0 0.0
    %1579 = vmatpush2.msra.mxu0 0.0
    %1580 = vmatprep.subr.mxu0 0.0
    %1581 = vmatpush2.msra.mxu0 0.0
    %1582 = vmatprep.subr.mxu0 0.0
    %1583 = vmatpush2.msra.mxu0 0.0
    %1584 = vmatprep.subr.mxu0 0.0
    %1585 = vmatpush2.msra.mxu0 0.0
    %1586 = vmatprep.subr.mxu0 0.0
    %1587 = vmatpush2.msra.mxu0 0.0
    %1588 = vmatprep.subr.mxu0 0.0
    %1589 = vmatpush2.msra.mxu0 0.0
    %1590 = vmatprep.subr.mxu0 0.0
    %1591 = vmatpush2.msra.mxu0 0.0
    %1592 = vmatprep.subr.mxu0 0.0
    %1593 = vmatpush2.msra.mxu0 0.0
    %1594 = vmatprep.subr.mxu0 0.0
    %1595 = vmatpush2.msra.mxu0 0.0
    %1596 = vmatprep.subr.mxu0 0.0
    %1597 = vmatpush2.msra.mxu0 0.0
    %1598 = vmatprep.subr.mxu0 0.0
    %1599 = vmatpush2.msra.mxu0 0.0
    %1600 = vmatprep.subr.mxu0 0.0
    %1601 = vmatpush2.msra.mxu0 0.0
    %1602 = vmatprep.subr.mxu0 0.0
    %1603 = vmatpush2.msra.mxu0 0.0
    %1604 = vmatprep.mubr.f32.mxu0 0.0
    %1605 = vmatmul.mubr.f32.gmra.mxu0 %v1538
    %v1606 = vpop.f32.mrf.mxu0
    %v1607 = vadd.f32 %v1534, %v1606
    %v1608 = vpop.f32.mrf.mxu0
    %1609 = vdwg.mxu0
    %1610 = vst [vmem:[#allocation11] sm:$0x3] %v1607
    // Predicated region
    $region46: #{tpu_custom_call.1} parent=1 // pred_check
      _
    $region47: #{tpu_custom_call.1} parent=1 // pred_check_branch
      %1612 = sbr.rel (0) target = $region49
    $region48: #{tpu_custom_call.1} parent=1 // pred_region
      %s1614 = ssub.s32 32, 32
      %1615 = vsyncadd [#allocation4], %s1614
      %s1617 = sshll.u32 [#allocation11], 4
      %s1618 = int_to_ptr.vmem [resolvable:$true] %s1617
      %1620 = dma.vmem_to_hbm [thread:$0]  %s1618, 32, %s6, [#allocation4]
    $region49: #{tpu_custom_call.1} parent=1 // pred_fallthru
      _
    // Predicated region
    $region50: #{tpu_custom_call.1} parent=1 // pred_check
      _
    $region51: #{tpu_custom_call.1} parent=1 // pred_check_branch
      %1622 = sbr.rel (0) target = $region53
    $region52: #{tpu_custom_call.1} parent=1 // pred_region
      %1623 = dma.done [#allocation4], 32
    $region53: #{tpu_custom_call.1} parent=1 // pred_fallthru
      _
    %1624 = vsyncpa [#allocation3], 1
    %1625 = vsyncpa [#allocation6], 1
    %1626 = vsyncpa [#allocation9], 1
    %1627 = vsyncpa [#allocation4], 1

</llo_original>
